<compile_context>
chip_gen: v5e
topology: v5e:2x2
jax: 0.10.0
libtpu: 0.0.40
codegen_flags: <defaults>
</compile_context>

<pallas_src>
import math

import jax
import jax.numpy as jnp
from jax import lax
from jax.experimental import pallas as pl
from jax.experimental.pallas import tpu as pltpu


# ------------------------------ fused kernel --------------------------------

def _make_fused_kernel(B, KH2, C1, C2):
    """conv1 -> (dropout) -> conv2 -> fc3 -> softmax, all in VMEM.

    Kernel refs:
      xs_ref  : (KH2*B, KW)    stride-5 input rows, ordered (tap-major, batch-minor)
      w1t_ref : (KW, C1)       conv1 weight flattened over kw, transposed
      b1_ref  : (1, C1)
      w2t_ref : (KH2, C1, C2)  conv2 weight reordered to [kh, ci, co]
      b2_ref  : (1, C2)
      wf3t_ref: (C2, G)        fc3 weight transposed
      bf3_ref : (1, G)
      o_ref   : (B, G)         softmax probabilities
    """

    def kernel(xs_ref, w1t_ref, b1_ref, w2t_ref, b2_ref, wf3t_ref, bf3_ref, o_ref):
        # conv1: every needed (tap, batch) patch row in one MXU matmul -> (KH2*B, C1).
        y1 = (jnp.dot(xs_ref[...], w1t_ref[...],
                      preferred_element_type=jnp.float32) + b1_ref[...])

        # TODO(synk): F.dropout defaults to training=True in the PyTorch module; it is
        # implemented as identity (inference / eval semantics) to stay deterministic.

        # conv2 (kernel (KH2,1), stride 2, single 1x1 output position): statically
        # unrolled accumulation over the KH2 height taps.  Each tap's conv1 rows are a
        # contiguous B-row slice because xs rows are (tap-major, batch-minor).
        y2 = jnp.zeros((B, C2), jnp.float32) + b2_ref[...]
        for h in range(KH2):
            y2 = y2 + jnp.dot(y1[h * B:(h + 1) * B, :], w2t_ref[h],
                              preferred_element_type=jnp.float32)

        # x.view(B, -1) is exactly (B, C2) here; fc3 + numerically stable softmax(dim=1).
        logits = (jnp.dot(y2, wf3t_ref[...],
                          preferred_element_type=jnp.float32) + bf3_ref[...])
        m = jnp.max(logits, axis=-1, keepdims=True)
        e = jnp.exp(logits - m)
        o_ref[...] = e / jnp.sum(e, axis=-1, keepdims=True)

    return kernel


# -------------------------------- wrapper ------------------------------------

def conv_classifier2d_forward(x, params):
    """Forward pass of ConvClassifier2D (inference) via one fused Pallas kernel."""
    B, H, W = x.shape
    x = x.astype(jnp.float32)

    w1, b1 = params["conv1_w"], params["conv1_b"]      # (C1, 1, 1, KW), (C1,)
    w2, b2 = params["conv2_w"], params["conv2_b"]      # (C2, C1, KH2, 1), (C2,)
    wf3, bf3 = params["fc3_w"], params["fc3_b"]        # (G, C2), (G,)

    C1, _, KH1, KW = w1.shape
    C2, _, KH2, KW2 = w2.shape
    G = wf3.shape[0]
    S1, S2 = 5, 2                                       # conv1 / conv2 strides

    # Spatial sizes implied by the module.  The forward is only self-consistent when
    # conv2's output is 1x1 so that view(B, -1) matches fc3.in_features (= 10).
    H1 = (H - KH1) // S1 + 1
    W1 = (W - KW) // S1 + 1
    H2 = (H1 - KH2) // S2 + 1
    W2 = (W1 - KW2) // S2 + 1
    assert H2 == 1 and W2 == 1 and C2 * H2 * W2 == wf3.shape[1], (
        "input_dimensions inconsistent with fc3", (H1, W1, H2, W2, C2, wf3.shape))

    # Layout glue on <= 0.33 MB (no im2col): pick only the stride-S1 rows and the
    # single width window the two convs actually consume, ordered (tap-major,
    # batch-minor) so each conv2 tap is a contiguous row slice inside the kernel.
    xs = x[:, : S1 * (KH2 - 1) + 1: S1, :KW]                       # (B, KH2, KW)
    xs2d = jnp.transpose(xs, (1, 0, 2)).reshape(KH2 * B, KW)       # (KH2*B, KW)

    # One-time weight re-layouts (tiny).
    w1t = w1.reshape(C1, KW).T.astype(jnp.float32)                       # (KW, C1)
    w2t = jnp.transpose(w2[:, :, :, 0], (2, 1, 0)).astype(jnp.float32)   # (KH2, C1, C2)
    wf3t = wf3.T.astype(jnp.float32)                                     # (C2, G)
    b1r = b1.reshape(1, C1).astype(jnp.float32)
    b2r = b2.reshape(1, C2).astype(jnp.float32)
    bf3r = bf3.reshape(1, G).astype(jnp.float32)

    kernel = _make_fused_kernel(B, KH2, C1, C2)
    return pl.pallas_call(
        kernel,
        out_shape=jax.ShapeDtypeStruct((B, G), jnp.float32),
        # No grid: all operands (~0.5 MB) are placed whole in VMEM; intermediates never
        # touch HBM.  16 MiB scoped VMEM is ample headroom on v5e / v6e / v7x.
        compiler_params=pltpu.CompilerParams(vmem_limit_bytes=16 * 1024 * 1024),
    )(xs2d, w1t, b1r, w2t, b2r, wf3t, bf3r)


# ---------------------------- reference & init --------------------------------

def _reference_forward(x, params):
    """Pure-JAX (XLA) reference of the PyTorch forward, for validation only."""
    B = x.shape[0]
    h = x[:, None, :, :].astype(jnp.float32)                             # (B,1,H,W)
    h = lax.conv_general_dilated(
        h, params["conv1_w"], window_strides=(5, 5), padding="VALID",
        dimension_numbers=("NCHW", "OIHW", "NCHW"))
    h = h + params["conv1_b"][None, :, None, None]
    # dropout: identity (inference)
    h = lax.conv_general_dilated(
        h, params["conv2_w"], window_strides=(2, 2), padding="VALID",
        dimension_numbers=("NCHW", "OIHW", "NCHW"))
    h = h + params["conv2_b"][None, :, None, None]
    h = h.reshape(B, -1)
    h = h @ params["fc3_w"].T + params["fc3_b"]
    return jax.nn.softmax(h, axis=1)


def init_params(key, num_of_genres=4):
    """PyTorch-default U(+-1/sqrt(fan_in)) init for the layers used by forward()."""
    def u(k, shape, fan_in):
        bound = 1.0 / math.sqrt(fan_in)
        return jax.random.uniform(k, shape, jnp.float32, -bound, bound)

    ks = jax.random.split(key, 6)
    return {
        "conv1_w": u(ks[0], (10, 1, 1, 2000), 1 * 1 * 2000),   # Conv2d(1, 10, (1,2000), s=5)
        "conv1_b": u(ks[1], (10,), 1 * 1 * 2000),
        "conv2_w": u(ks[2], (10, 10, 20, 1), 10 * 20 * 1),     # Conv2d(10, 10, (20,1), s=2)
        "conv2_b": u(ks[3], (10,), 10 * 20 * 1),
        "fc3_w": u(ks[4], (num_of_genres, 10), 10),            # Linear(10, num_of_genres)
        "fc3_b": u(ks[5], (num_of_genres,), 10),
    }
    # NOTE: fc1, fc2 and the MaxPool2d layers exist in __init__ but are never used in
    # forward(), so they are not ported.


# --------------------------------- main ---------------------------------------

if __name__ == "__main__":
    BATCH = 2
    NUM_GENRES = 4
    # Smallest input_dimensions for which the module's forward is self-consistent:
    # conv1 (1x2000, stride 5): (96,2000) -> (10, 20, 1); conv2 (20x1, stride 2) -> (10,1,1)
    # -> view(B,-1) == (B, 10) == fc3.in_features.
    H, W = 96, 2000

    key = jax.random.PRNGKey(0)
    pkey, xkey = jax.random.split(key)
    params = init_params(pkey, NUM_GENRES)
    x = jax.random.normal(xkey, (BATCH, H, W), dtype=jnp.float32)

    fwd = jax.jit(conv_classifier2d_forward)
    out = jax.block_until_ready(fwd(x, params))

    assert out.shape == (BATCH, NUM_GENRES), out.shape
    assert bool(jnp.all(jnp.isfinite(out)))
    assert bool(jnp.allclose(jnp.sum(out, axis=-1), 1.0, atol=1e-4))

    ref = _reference_forward(x, params)
    assert bool(jnp.allclose(out, ref, atol=2e-2)), (out, ref)

    print("KERNEL_OK")
</pallas_src>

<mosaic_0001>
module attributes {stable_mosaic.version = 11 : i64} {
  func.func @kernel(%arg0: memref<40x2000xf32, #tpu.memory_space<vmem>>, %arg1: memref<2000x10xf32, #tpu.memory_space<vmem>>, %arg2: memref<1x10xf32, #tpu.memory_space<vmem>>, %arg3: memref<20x10x10xf32, #tpu.memory_space<vmem>>, %arg4: memref<1x10xf32, #tpu.memory_space<vmem>>, %arg5: memref<10x4xf32, #tpu.memory_space<vmem>>, %arg6: memref<1x4xf32, #tpu.memory_space<vmem>>, %arg7: memref<2x4xf32, #tpu.memory_space<vmem>>) attributes {dimension_semantics = [], scalar_prefetch = 0 : i64, scratch_operands = 0 : i64, tpu.core_type = #tpu.core_type<tc>} {
    %c0 = arith.constant 0 : index
    %c0_0 = arith.constant 0 : index
    %0 = vector.load %arg0[%c0, %c0_0] : memref<40x2000xf32, #tpu.memory_space<vmem>>, vector<40x2000xf32>
    %c0_1 = arith.constant 0 : index
    %c0_2 = arith.constant 0 : index
    %1 = vector.load %arg1[%c0_1, %c0_2] : memref<2000x10xf32, #tpu.memory_space<vmem>>, vector<2000x10xf32>
    %cst = arith.constant dense<0.000000e+00> : vector<40x10xf32>
    %2 = tpu.matmul %0, %1, %cst {dimension_numbers = #tpu.dot_dimension_numbers<[1], [0], [0], [1], [0, 0, 1, 1], [], []>} : vector<40x2000xf32>, vector<2000x10xf32>, vector<40x10xf32> -> vector<40x10xf32>
    %c0_3 = arith.constant 0 : index
    %c0_4 = arith.constant 0 : index
    %3 = vector.load %arg2[%c0_3, %c0_4] : memref<1x10xf32, #tpu.memory_space<vmem>>, vector<1x10xf32>
    %4 = vector.broadcast %3 : vector<1x10xf32> to vector<40x10xf32>
    %5 = arith.addf %2, %4 : vector<40x10xf32>
    %cst_5 = arith.constant 0.000000e+00 : f32
    %6 = vector.broadcast %cst_5 : f32 to vector<2x10xf32>
    %c0_6 = arith.constant 0 : index
    %c0_7 = arith.constant 0 : index
    %7 = vector.load %arg4[%c0_6, %c0_7] : memref<1x10xf32, #tpu.memory_space<vmem>>, vector<1x10xf32>
    %8 = vector.broadcast %7 : vector<1x10xf32> to vector<2x10xf32>
    %9 = arith.addf %6, %8 : vector<2x10xf32>
    %10 = vector.extract_strided_slice %5 {offsets = [0, 0], sizes = [2, 10], strides = [1, 1]} : vector<40x10xf32> to vector<2x10xf32>
    %c0_8 = arith.constant 0 : index
    %c0_9 = arith.constant 0 : index
    %c0_10 = arith.constant 0 : index
    %11 = vector.load %arg3[%c0_8, %c0_9, %c0_10] : memref<20x10x10xf32, #tpu.memory_space<vmem>>, vector<1x10x10xf32>
    %12 = vector.shape_cast %11 : vector<1x10x10xf32> to vector<10x10xf32>
    %cst_11 = arith.constant dense<0.000000e+00> : vector<2x10xf32>
    %13 = tpu.matmul %10, %12, %cst_11 {dimension_numbers = #tpu.dot_dimension_numbers<[1], [0], [0], [1], [0, 0, 1, 1], [], []>} : vector<2x10xf32>, vector<10x10xf32>, vector<2x10xf32> -> vector<2x10xf32>
    %14 = arith.addf %9, %13 : vector<2x10xf32>
    %15 = vector.extract_strided_slice %5 {offsets = [2, 0], sizes = [2, 10], strides = [1, 1]} : vector<40x10xf32> to vector<2x10xf32>
    %c1 = arith.constant 1 : index
    %c0_12 = arith.constant 0 : index
    %c0_13 = arith.constant 0 : index
    %16 = vector.load %arg3[%c1, %c0_12, %c0_13] : memref<20x10x10xf32, #tpu.memory_space<vmem>>, vector<1x10x10xf32>
    %17 = vector.shape_cast %16 : vector<1x10x10xf32> to vector<10x10xf32>
    %cst_14 = arith.constant dense<0.000000e+00> : vector<2x10xf32>
    %18 = tpu.matmul %15, %17, %cst_14 {dimension_numbers = #tpu.dot_dimension_numbers<[1], [0], [0], [1], [0, 0, 1, 1], [], []>} : vector<2x10xf32>, vector<10x10xf32>, vector<2x10xf32> -> vector<2x10xf32>
    %19 = arith.addf %14, %18 : vector<2x10xf32>
    %20 = vector.extract_strided_slice %5 {offsets = [4, 0], sizes = [2, 10], strides = [1, 1]} : vector<40x10xf32> to vector<2x10xf32>
    %c2 = arith.constant 2 : index
    %c0_15 = arith.constant 0 : index
    %c0_16 = arith.constant 0 : index
    %21 = vector.load %arg3[%c2, %c0_15, %c0_16] : memref<20x10x10xf32, #tpu.memory_space<vmem>>, vector<1x10x10xf32>
    %22 = vector.shape_cast %21 : vector<1x10x10xf32> to vector<10x10xf32>
    %cst_17 = arith.constant dense<0.000000e+00> : vector<2x10xf32>
    %23 = tpu.matmul %20, %22, %cst_17 {dimension_numbers = #tpu.dot_dimension_numbers<[1], [0], [0], [1], [0, 0, 1, 1], [], []>} : vector<2x10xf32>, vector<10x10xf32>, vector<2x10xf32> -> vector<2x10xf32>
    %24 = arith.addf %19, %23 : vector<2x10xf32>
    %25 = vector.extract_strided_slice %5 {offsets = [6, 0], sizes = [2, 10], strides = [1, 1]} : vector<40x10xf32> to vector<2x10xf32>
    %c3 = arith.constant 3 : index
    %c0_18 = arith.constant 0 : index
    %c0_19 = arith.constant 0 : index
    %26 = vector.load %arg3[%c3, %c0_18, %c0_19] : memref<20x10x10xf32, #tpu.memory_space<vmem>>, vector<1x10x10xf32>
    %27 = vector.shape_cast %26 : vector<1x10x10xf32> to vector<10x10xf32>
    %cst_20 = arith.constant dense<0.000000e+00> : vector<2x10xf32>
    %28 = tpu.matmul %25, %27, %cst_20 {dimension_numbers = #tpu.dot_dimension_numbers<[1], [0], [0], [1], [0, 0, 1, 1], [], []>} : vector<2x10xf32>, vector<10x10xf32>, vector<2x10xf32> -> vector<2x10xf32>
    %29 = arith.addf %24, %28 : vector<2x10xf32>
    %30 = vector.extract_strided_slice %5 {offsets = [8, 0], sizes = [2, 10], strides = [1, 1]} : vector<40x10xf32> to vector<2x10xf32>
    %c4 = arith.constant 4 : index
    %c0_21 = arith.constant 0 : index
    %c0_22 = arith.constant 0 : index
    %31 = vector.load %arg3[%c4, %c0_21, %c0_22] : memref<20x10x10xf32, #tpu.memory_space<vmem>>, vector<1x10x10xf32>
    %32 = vector.shape_cast %31 : vector<1x10x10xf32> to vector<10x10xf32>
    %cst_23 = arith.constant dense<0.000000e+00> : vector<2x10xf32>
    %33 = tpu.matmul %30, %32, %cst_23 {dimension_numbers = #tpu.dot_dimension_numbers<[1], [0], [0], [1], [0, 0, 1, 1], [], []>} : vector<2x10xf32>, vector<10x10xf32>, vector<2x10xf32> -> vector<2x10xf32>
    %34 = arith.addf %29, %33 : vector<2x10xf32>
    %35 = vector.extract_strided_slice %5 {offsets = [10, 0], sizes = [2, 10], strides = [1, 1]} : vector<40x10xf32> to vector<2x10xf32>
    %c5 = arith.constant 5 : index
    %c0_24 = arith.constant 0 : index
    %c0_25 = arith.constant 0 : index
    %36 = vector.load %arg3[%c5, %c0_24, %c0_25] : memref<20x10x10xf32, #tpu.memory_space<vmem>>, vector<1x10x10xf32>
    %37 = vector.shape_cast %36 : vector<1x10x10xf32> to vector<10x10xf32>
    %cst_26 = arith.constant dense<0.000000e+00> : vector<2x10xf32>
    %38 = tpu.matmul %35, %37, %cst_26 {dimension_numbers = #tpu.dot_dimension_numbers<[1], [0], [0], [1], [0, 0, 1, 1], [], []>} : vector<2x10xf32>, vector<10x10xf32>, vector<2x10xf32> -> vector<2x10xf32>
    %39 = arith.addf %34, %38 : vector<2x10xf32>
    %40 = vector.extract_strided_slice %5 {offsets = [12, 0], sizes = [2, 10], strides = [1, 1]} : vector<40x10xf32> to vector<2x10xf32>
    %c6 = arith.constant 6 : index
    %c0_27 = arith.constant 0 : index
    %c0_28 = arith.constant 0 : index
    %41 = vector.load %arg3[%c6, %c0_27, %c0_28] : memref<20x10x10xf32, #tpu.memory_space<vmem>>, vector<1x10x10xf32>
    %42 = vector.shape_cast %41 : vector<1x10x10xf32> to vector<10x10xf32>
    %cst_29 = arith.constant dense<0.000000e+00> : vector<2x10xf32>
    %43 = tpu.matmul %40, %42, %cst_29 {dimension_numbers = #tpu.dot_dimension_numbers<[1], [0], [0], [1], [0, 0, 1, 1], [], []>} : vector<2x10xf32>, vector<10x10xf32>, vector<2x10xf32> -> vector<2x10xf32>
    %44 = arith.addf %39, %43 : vector<2x10xf32>
    %45 = vector.extract_strided_slice %5 {offsets = [14, 0], sizes = [2, 10], strides = [1, 1]} : vector<40x10xf32> to vector<2x10xf32>
    %c7 = arith.constant 7 : index
    %c0_30 = arith.constant 0 : index
    %c0_31 = arith.constant 0 : index
    %46 = vector.load %arg3[%c7, %c0_30, %c0_31] : memref<20x10x10xf32, #tpu.memory_space<vmem>>, vector<1x10x10xf32>
    %47 = vector.shape_cast %46 : vector<1x10x10xf32> to vector<10x10xf32>
    %cst_32 = arith.constant dense<0.000000e+00> : vector<2x10xf32>
    %48 = tpu.matmul %45, %47, %cst_32 {dimension_numbers = #tpu.dot_dimension_numbers<[1], [0], [0], [1], [0, 0, 1, 1], [], []>} : vector<2x10xf32>, vector<10x10xf32>, vector<2x10xf32> -> vector<2x10xf32>
    %49 = arith.addf %44, %48 : vector<2x10xf32>
    %50 = vector.extract_strided_slice %5 {offsets = [16, 0], sizes = [2, 10], strides = [1, 1]} : vector<40x10xf32> to vector<2x10xf32>
    %c8 = arith.constant 8 : index
    %c0_33 = arith.constant 0 : index
    %c0_34 = arith.constant 0 : index
    %51 = vector.load %arg3[%c8, %c0_33, %c0_34] : memref<20x10x10xf32, #tpu.memory_space<vmem>>, vector<1x10x10xf32>
    %52 = vector.shape_cast %51 : vector<1x10x10xf32> to vector<10x10xf32>
    %cst_35 = arith.constant dense<0.000000e+00> : vector<2x10xf32>
    %53 = tpu.matmul %50, %52, %cst_35 {dimension_numbers = #tpu.dot_dimension_numbers<[1], [0], [0], [1], [0, 0, 1, 1], [], []>} : vector<2x10xf32>, vector<10x10xf32>, vector<2x10xf32> -> vector<2x10xf32>
    %54 = arith.addf %49, %53 : vector<2x10xf32>
    %55 = vector.extract_strided_slice %5 {offsets = [18, 0], sizes = [2, 10], strides = [1, 1]} : vector<40x10xf32> to vector<2x10xf32>
    %c9 = arith.constant 9 : index
    %c0_36 = arith.constant 0 : index
    %c0_37 = arith.constant 0 : index
    %56 = vector.load %arg3[%c9, %c0_36, %c0_37] : memref<20x10x10xf32, #tpu.memory_space<vmem>>, vector<1x10x10xf32>
    %57 = vector.shape_cast %56 : vector<1x10x10xf32> to vector<10x10xf32>
    %cst_38 = arith.constant dense<0.000000e+00> : vector<2x10xf32>
    %58 = tpu.matmul %55, %57, %cst_38 {dimension_numbers = #tpu.dot_dimension_numbers<[1], [0], [0], [1], [0, 0, 1, 1], [], []>} : vector<2x10xf32>, vector<10x10xf32>, vector<2x10xf32> -> vector<2x10xf32>
    %59 = arith.addf %54, %58 : vector<2x10xf32>
    %60 = vector.extract_strided_slice %5 {offsets = [20, 0], sizes = [2, 10], strides = [1, 1]} : vector<40x10xf32> to vector<2x10xf32>
    %c10 = arith.constant 10 : index
    %c0_39 = arith.constant 0 : index
    %c0_40 = arith.constant 0 : index
    %61 = vector.load %arg3[%c10, %c0_39, %c0_40] : memref<20x10x10xf32, #tpu.memory_space<vmem>>, vector<1x10x10xf32>
    %62 = vector.shape_cast %61 : vector<1x10x10xf32> to vector<10x10xf32>
    %cst_41 = arith.constant dense<0.000000e+00> : vector<2x10xf32>
    %63 = tpu.matmul %60, %62, %cst_41 {dimension_numbers = #tpu.dot_dimension_numbers<[1], [0], [0], [1], [0, 0, 1, 1], [], []>} : vector<2x10xf32>, vector<10x10xf32>, vector<2x10xf32> -> vector<2x10xf32>
    %64 = arith.addf %59, %63 : vector<2x10xf32>
    %65 = vector.extract_strided_slice %5 {offsets = [22, 0], sizes = [2, 10], strides = [1, 1]} : vector<40x10xf32> to vector<2x10xf32>
    %c11 = arith.constant 11 : index
    %c0_42 = arith.constant 0 : index
    %c0_43 = arith.constant 0 : index
    %66 = vector.load %arg3[%c11, %c0_42, %c0_43] : memref<20x10x10xf32, #tpu.memory_space<vmem>>, vector<1x10x10xf32>
    %67 = vector.shape_cast %66 : vector<1x10x10xf32> to vector<10x10xf32>
    %cst_44 = arith.constant dense<0.000000e+00> : vector<2x10xf32>
    %68 = tpu.matmul %65, %67, %cst_44 {dimension_numbers = #tpu.dot_dimension_numbers<[1], [0], [0], [1], [0, 0, 1, 1], [], []>} : vector<2x10xf32>, vector<10x10xf32>, vector<2x10xf32> -> vector<2x10xf32>
    %69 = arith.addf %64, %68 : vector<2x10xf32>
    %70 = vector.extract_strided_slice %5 {offsets = [24, 0], sizes = [2, 10], strides = [1, 1]} : vector<40x10xf32> to vector<2x10xf32>
    %c12 = arith.constant 12 : index
    %c0_45 = arith.constant 0 : index
    %c0_46 = arith.constant 0 : index
    %71 = vector.load %arg3[%c12, %c0_45, %c0_46] : memref<20x10x10xf32, #tpu.memory_space<vmem>>, vector<1x10x10xf32>
    %72 = vector.shape_cast %71 : vector<1x10x10xf32> to vector<10x10xf32>
    %cst_47 = arith.constant dense<0.000000e+00> : vector<2x10xf32>
    %73 = tpu.matmul %70, %72, %cst_47 {dimension_numbers = #tpu.dot_dimension_numbers<[1], [0], [0], [1], [0, 0, 1, 1], [], []>} : vector<2x10xf32>, vector<10x10xf32>, vector<2x10xf32> -> vector<2x10xf32>
    %74 = arith.addf %69, %73 : vector<2x10xf32>
    %75 = vector.extract_strided_slice %5 {offsets = [26, 0], sizes = [2, 10], strides = [1, 1]} : vector<40x10xf32> to vector<2x10xf32>
    %c13 = arith.constant 13 : index
    %c0_48 = arith.constant 0 : index
    %c0_49 = arith.constant 0 : index
    %76 = vector.load %arg3[%c13, %c0_48, %c0_49] : memref<20x10x10xf32, #tpu.memory_space<vmem>>, vector<1x10x10xf32>
    %77 = vector.shape_cast %76 : vector<1x10x10xf32> to vector<10x10xf32>
    %cst_50 = arith.constant dense<0.000000e+00> : vector<2x10xf32>
    %78 = tpu.matmul %75, %77, %cst_50 {dimension_numbers = #tpu.dot_dimension_numbers<[1], [0], [0], [1], [0, 0, 1, 1], [], []>} : vector<2x10xf32>, vector<10x10xf32>, vector<2x10xf32> -> vector<2x10xf32>
    %79 = arith.addf %74, %78 : vector<2x10xf32>
    %80 = vector.extract_strided_slice %5 {offsets = [28, 0], sizes = [2, 10], strides = [1, 1]} : vector<40x10xf32> to vector<2x10xf32>
    %c14 = arith.constant 14 : index
    %c0_51 = arith.constant 0 : index
    %c0_52 = arith.constant 0 : index
    %81 = vector.load %arg3[%c14, %c0_51, %c0_52] : memref<20x10x10xf32, #tpu.memory_space<vmem>>, vector<1x10x10xf32>
    %82 = vector.shape_cast %81 : vector<1x10x10xf32> to vector<10x10xf32>
    %cst_53 = arith.constant dense<0.000000e+00> : vector<2x10xf32>
    %83 = tpu.matmul %80, %82, %cst_53 {dimension_numbers = #tpu.dot_dimension_numbers<[1], [0], [0], [1], [0, 0, 1, 1], [], []>} : vector<2x10xf32>, vector<10x10xf32>, vector<2x10xf32> -> vector<2x10xf32>
    %84 = arith.addf %79, %83 : vector<2x10xf32>
    %85 = vector.extract_strided_slice %5 {offsets = [30, 0], sizes = [2, 10], strides = [1, 1]} : vector<40x10xf32> to vector<2x10xf32>
    %c15 = arith.constant 15 : index
    %c0_54 = arith.constant 0 : index
    %c0_55 = arith.constant 0 : index
    %86 = vector.load %arg3[%c15, %c0_54, %c0_55] : memref<20x10x10xf32, #tpu.memory_space<vmem>>, vector<1x10x10xf32>
    %87 = vector.shape_cast %86 : vector<1x10x10xf32> to vector<10x10xf32>
    %cst_56 = arith.constant dense<0.000000e+00> : vector<2x10xf32>
    %88 = tpu.matmul %85, %87, %cst_56 {dimension_numbers = #tpu.dot_dimension_numbers<[1], [0], [0], [1], [0, 0, 1, 1], [], []>} : vector<2x10xf32>, vector<10x10xf32>, vector<2x10xf32> -> vector<2x10xf32>
    %89 = arith.addf %84, %88 : vector<2x10xf32>
    %90 = vector.extract_strided_slice %5 {offsets = [32, 0], sizes = [2, 10], strides = [1, 1]} : vector<40x10xf32> to vector<2x10xf32>
    %c16 = arith.constant 16 : index
    %c0_57 = arith.constant 0 : index
    %c0_58 = arith.constant 0 : index
    %91 = vector.load %arg3[%c16, %c0_57, %c0_58] : memref<20x10x10xf32, #tpu.memory_space<vmem>>, vector<1x10x10xf32>
    %92 = vector.shape_cast %91 : vector<1x10x10xf32> to vector<10x10xf32>
    %cst_59 = arith.constant dense<0.000000e+00> : vector<2x10xf32>
    %93 = tpu.matmul %90, %92, %cst_59 {dimension_numbers = #tpu.dot_dimension_numbers<[1], [0], [0], [1], [0, 0, 1, 1], [], []>} : vector<2x10xf32>, vector<10x10xf32>, vector<2x10xf32> -> vector<2x10xf32>
    %94 = arith.addf %89, %93 : vector<2x10xf32>
    %95 = vector.extract_strided_slice %5 {offsets = [34, 0], sizes = [2, 10], strides = [1, 1]} : vector<40x10xf32> to vector<2x10xf32>
    %c17 = arith.constant 17 : index
    %c0_60 = arith.constant 0 : index
    %c0_61 = arith.constant 0 : index
    %96 = vector.load %arg3[%c17, %c0_60, %c0_61] : memref<20x10x10xf32, #tpu.memory_space<vmem>>, vector<1x10x10xf32>
    %97 = vector.shape_cast %96 : vector<1x10x10xf32> to vector<10x10xf32>
    %cst_62 = arith.constant dense<0.000000e+00> : vector<2x10xf32>
    %98 = tpu.matmul %95, %97, %cst_62 {dimension_numbers = #tpu.dot_dimension_numbers<[1], [0], [0], [1], [0, 0, 1, 1], [], []>} : vector<2x10xf32>, vector<10x10xf32>, vector<2x10xf32> -> vector<2x10xf32>
    %99 = arith.addf %94, %98 : vector<2x10xf32>
    %100 = vector.extract_strided_slice %5 {offsets = [36, 0], sizes = [2, 10], strides = [1, 1]} : vector<40x10xf32> to vector<2x10xf32>
    %c18 = arith.constant 18 : index
    %c0_63 = arith.constant 0 : index
    %c0_64 = arith.constant 0 : index
    %101 = vector.load %arg3[%c18, %c0_63, %c0_64] : memref<20x10x10xf32, #tpu.memory_space<vmem>>, vector<1x10x10xf32>
    %102 = vector.shape_cast %101 : vector<1x10x10xf32> to vector<10x10xf32>
    %cst_65 = arith.constant dense<0.000000e+00> : vector<2x10xf32>
    %103 = tpu.matmul %100, %102, %cst_65 {dimension_numbers = #tpu.dot_dimension_numbers<[1], [0], [0], [1], [0, 0, 1, 1], [], []>} : vector<2x10xf32>, vector<10x10xf32>, vector<2x10xf32> -> vector<2x10xf32>
    %104 = arith.addf %99, %103 : vector<2x10xf32>
    %105 = vector.extract_strided_slice %5 {offsets = [38, 0], sizes = [2, 10], strides = [1, 1]} : vector<40x10xf32> to vector<2x10xf32>
    %c19 = arith.constant 19 : index
    %c0_66 = arith.constant 0 : index
    %c0_67 = arith.constant 0 : index
    %106 = vector.load %arg3[%c19, %c0_66, %c0_67] : memref<20x10x10xf32, #tpu.memory_space<vmem>>, vector<1x10x10xf32>
    %107 = vector.shape_cast %106 : vector<1x10x10xf32> to vector<10x10xf32>
    %cst_68 = arith.constant dense<0.000000e+00> : vector<2x10xf32>
    %108 = tpu.matmul %105, %107, %cst_68 {dimension_numbers = #tpu.dot_dimension_numbers<[1], [0], [0], [1], [0, 0, 1, 1], [], []>} : vector<2x10xf32>, vector<10x10xf32>, vector<2x10xf32> -> vector<2x10xf32>
    %109 = arith.addf %104, %108 : vector<2x10xf32>
    %c0_69 = arith.constant 0 : index
    %c0_70 = arith.constant 0 : index
    %110 = vector.load %arg5[%c0_69, %c0_70] : memref<10x4xf32, #tpu.memory_space<vmem>>, vector<10x4xf32>
    %cst_71 = arith.constant dense<0.000000e+00> : vector<2x4xf32>
    %111 = tpu.matmul %109, %110, %cst_71 {dimension_numbers = #tpu.dot_dimension_numbers<[1], [0], [0], [1], [0, 0, 1, 1], [], []>} : vector<2x10xf32>, vector<10x4xf32>, vector<2x4xf32> -> vector<2x4xf32>
    %c0_72 = arith.constant 0 : index
    %c0_73 = arith.constant 0 : index
    %112 = vector.load %arg6[%c0_72, %c0_73] : memref<1x4xf32, #tpu.memory_space<vmem>>, vector<1x4xf32>
    %113 = vector.broadcast %112 : vector<1x4xf32> to vector<2x4xf32>
    %114 = arith.addf %111, %113 : vector<2x4xf32>
    %cst_74 = arith.constant dense<0xFF800000> : vector<2xf32>
    %115 = vector.multi_reduction <maximumf>, %114, %cst_74 [1] : vector<2x4xf32> to vector<2xf32>
    %116 = vector.shape_cast %115 : vector<2xf32> to vector<2x1xf32>
    %117 = vector.broadcast %116 : vector<2x1xf32> to vector<2x4xf32>
    %118 = arith.subf %114, %117 : vector<2x4xf32>
    %119 = math.exp %118 : vector<2x4xf32>
    %cst_75 = arith.constant dense<0.000000e+00> : vector<2xf32>
    %120 = vector.multi_reduction <add>, %119, %cst_75 [1] : vector<2x4xf32> to vector<2xf32>
    %121 = vector.shape_cast %120 : vector<2xf32> to vector<2x1xf32>
    %122 = vector.broadcast %121 : vector<2x1xf32> to vector<2x4xf32>
    %123 = arith.divf %119, %122 : vector<2x4xf32>
    %c0_76 = arith.constant 0 : index
    %c0_77 = arith.constant 0 : index
    %124 = vector.load %arg7[%c0_76, %c0_77] : memref<2x4xf32, #tpu.memory_space<vmem>>, vector<2x4xf32>
    tpu.vector_store %arg7[%c0_76, %c0_77], %123 {strides = array<i32>} : memref<2x4xf32, #tpu.memory_space<vmem>>, vector<2x4xf32>,
    return
  }
}

</mosaic_0001>

<llo_original>
// kernel: conv_classifier2d_forward.1
$region0: #{conv_classifier2d_forward.1}
  #allocation0 [shape = 'u32[]', space=smem, size = 0x4, offset = 0x4, fixed_abs, tag = 'smem constant byte address 0x4 - core index']
  #allocation1 [shape = 'u32[72,128]{1,0:T(1,128)}', space=vmem, size = 0x9000, scoped, tag = 'internal scratch']
  %s0 = inlined_call_operand.vmem [shape: f32[40,2000], index: 0, kind: input, shape index: {}]
  %s1 = inlined_call_operand.vmem [shape: f32[2000,10], index: 1, kind: input, shape index: {}]
  %s2 = inlined_call_operand.vmem [shape: f32[1,10], index: 2, kind: input, shape index: {}]
  %s3 = inlined_call_operand.vmem [shape: f32[20,10,10], index: 3, kind: input, shape index: {}]
  %s4 = inlined_call_operand.vmem [shape: f32[1,10], index: 4, kind: input, shape index: {}]
  %s5 = inlined_call_operand.vmem [shape: f32[10,4], index: 5, kind: input, shape index: {}]
  %s6 = inlined_call_operand.vmem [shape: f32[1,4], index: 6, kind: input, shape index: {}]
  %s7 = inlined_call_operand.hbm [shape: f32[2,4], index: 7, kind: output, shape index: {}]
  %s8 = sld [smem:[#allocation0]]
  $region38: #{conv_classifier2d_forward.1} parent=0
    _
  %s10 = ssub.s32 1, %s8
  %s11 = scalar_select 0, %s10, %s8
  $region1: #{conv_classifier2d_forward.1} parent=0
    #allocation2 [shape = 'u8[1024]{0}', space=vmem, size = 0x400, scoped, tag = 'output window, operand 0, single buffered']
    #allocation3 [shape = 's32[1]{0}', space=sflag, size = 0x4, scoped, tag = 'scoped memory for conv_classifier2d_forward.1']
    %12 = vsyncpa [#allocation3], 0
    // Predicated region
    $region2: #{conv_classifier2d_forward.1} parent=1 // pred_check
      _
    $region3: #{conv_classifier2d_forward.1} parent=1 // pred_check_branch
      %14 = sbr.rel (0) target = $region5
    $region4: #{conv_classifier2d_forward.1} parent=1 // pred_region
      _
    $region5: #{conv_classifier2d_forward.1} parent=1 // pred_fallthru
      _
    // Predicated region
    $region6: #{conv_classifier2d_forward.1} parent=1 // pred_check
      _
    $region7: #{conv_classifier2d_forward.1} parent=1 // pred_check_branch
      %16 = sbr.rel (0) target = $region9
    $region8: #{conv_classifier2d_forward.1} parent=1 // pred_region
      _
    $region9: #{conv_classifier2d_forward.1} parent=1 // pred_fallthru
      _
    // Predicated region
    $region10: #{conv_classifier2d_forward.1} parent=1 // pred_check
      _
    $region11: #{conv_classifier2d_forward.1} parent=1 // pred_check_branch
      %18 = sbr.rel (0) target = $region13
    $region12: #{conv_classifier2d_forward.1} parent=1 // pred_region
      _
    $region13: #{conv_classifier2d_forward.1} parent=1 // pred_fallthru
      _
    // Predicated region
    $region14: #{conv_classifier2d_forward.1} parent=1 // pred_check
      _
    $region15: #{conv_classifier2d_forward.1} parent=1 // pred_check_branch
      %20 = sbr.rel (0) target = $region17
    $region16: #{conv_classifier2d_forward.1} parent=1 // pred_region
      _
    $region17: #{conv_classifier2d_forward.1} parent=1 // pred_fallthru
      _
    // Predicated region
    $region18: #{conv_classifier2d_forward.1} parent=1 // pred_check
      _
    $region19: #{conv_classifier2d_forward.1} parent=1 // pred_check_branch
      %22 = sbr.rel (0) target = $region21
    $region20: #{conv_classifier2d_forward.1} parent=1 // pred_region
      _
    $region21: #{conv_classifier2d_forward.1} parent=1 // pred_fallthru
      _
    // Predicated region
    $region22: #{conv_classifier2d_forward.1} parent=1 // pred_check
      _
    $region23: #{conv_classifier2d_forward.1} parent=1 // pred_check_branch
      %24 = sbr.rel (0) target = $region25
    $region24: #{conv_classifier2d_forward.1} parent=1 // pred_region
      _
    $region25: #{conv_classifier2d_forward.1} parent=1 // pred_fallthru
      _
    // Predicated region
    $region26: #{conv_classifier2d_forward.1} parent=1 // pred_check
      _
    $region27: #{conv_classifier2d_forward.1} parent=1 // pred_check_branch
      %26 = sbr.rel (0) target = $region29
    $region28: #{conv_classifier2d_forward.1} parent=1 // pred_region
      _
    $region29: #{conv_classifier2d_forward.1} parent=1 // pred_fallthru
      _
    %v27 = vld [vmem:[%s0] sm:$0xff]
    %v28 = vld [vmem:[%s0 + $0x8] sm:$0xff]
    %v29 = vld [vmem:[%s0 + $0x10] sm:$0xff]
    %v30 = vld [vmem:[%s0 + $0x18] sm:$0xff]
    %v31 = vld [vmem:[%s0 + $0x20] sm:$0xff]
    %v32 = vld [vmem:[%s0 + $0x28] sm:$0xff]
    %v33 = vld [vmem:[%s0 + $0x30] sm:$0xff]
    %v34 = vld [vmem:[%s0 + $0x38] sm:$0xff]
    %v35 = vld [vmem:[%s0 + $0x40] sm:$0xff]
    %v36 = vld [vmem:[%s0 + $0x48] sm:$0xff]
    %v37 = vld [vmem:[%s0 + $0x50] sm:$0xff]
    %v38 = vld [vmem:[%s0 + $0x58] sm:$0xff]
    %v39 = vld [vmem:[%s0 + $0x60] sm:$0xff]
    %v40 = vld [vmem:[%s0 + $0x68] sm:$0xff]
    %v41 = vld [vmem:[%s0 + $0x70] sm:$0xff]
    %v42 = vld [vmem:[%s0 + $0x78] sm:$0xff]
    %v43 = vld [vmem:[%s0 + $0x80] sm:$0xff]
    %v44 = vld [vmem:[%s0 + $0x88] sm:$0xff]
    %v45 = vld [vmem:[%s0 + $0x90] sm:$0xff]
    %v46 = vld [vmem:[%s0 + $0x98] sm:$0xff]
    %v47 = vld [vmem:[%s0 + $0xa0] sm:$0xff]
    %v48 = vld [vmem:[%s0 + $0xa8] sm:$0xff]
    %v49 = vld [vmem:[%s0 + $0xb0] sm:$0xff]
    %v50 = vld [vmem:[%s0 + $0xb8] sm:$0xff]
    %v51 = vld [vmem:[%s0 + $0xc0] sm:$0xff]
    %v52 = vld [vmem:[%s0 + $0xc8] sm:$0xff]
    %v53 = vld [vmem:[%s0 + $0xd0] sm:$0xff]
    %v54 = vld [vmem:[%s0 + $0xd8] sm:$0xff]
    %v55 = vld [vmem:[%s0 + $0xe0] sm:$0xff]
    %v56 = vld [vmem:[%s0 + $0xe8] sm:$0xff]
    %v57 = vld [vmem:[%s0 + $0xf0] sm:$0xff]
    %v58 = vld [vmem:[%s0 + $0xf8] sm:$0xff]
    %v59 = vld [vmem:[%s0 + $0x100] sm:$0xff]
    %v60 = vld [vmem:[%s0 + $0x108] sm:$0xff]
    %v61 = vld [vmem:[%s0 + $0x110] sm:$0xff]
    %v62 = vld [vmem:[%s0 + $0x118] sm:$0xff]
    %v63 = vld [vmem:[%s0 + $0x120] sm:$0xff]
    %v64 = vld [vmem:[%s0 + $0x128] sm:$0xff]
    %v65 = vld [vmem:[%s0 + $0x130] sm:$0xff]
    %v66 = vld [vmem:[%s0 + $0x138] sm:$0xff]
    %v67 = vld [vmem:[%s0 + $0x140] sm:$0xff]
    %v68 = vld [vmem:[%s0 + $0x148] sm:$0xff]
    %v69 = vld [vmem:[%s0 + $0x150] sm:$0xff]
    %v70 = vld [vmem:[%s0 + $0x158] sm:$0xff]
    %v71 = vld [vmem:[%s0 + $0x160] sm:$0xff]
    %v72 = vld [vmem:[%s0 + $0x168] sm:$0xff]
    %v73 = vld [vmem:[%s0 + $0x170] sm:$0xff]
    %v74 = vld [vmem:[%s0 + $0x178] sm:$0xff]
    %v75 = vld [vmem:[%s0 + $0x180] sm:$0xff]
    %v76 = vld [vmem:[%s0 + $0x188] sm:$0xff]
    %v77 = vld [vmem:[%s0 + $0x190] sm:$0xff]
    %v78 = vld [vmem:[%s0 + $0x198] sm:$0xff]
    %v79 = vld [vmem:[%s0 + $0x1a0] sm:$0xff]
    %v80 = vld [vmem:[%s0 + $0x1a8] sm:$0xff]
    %v81 = vld [vmem:[%s0 + $0x1b0] sm:$0xff]
    %v82 = vld [vmem:[%s0 + $0x1b8] sm:$0xff]
    %v83 = vld [vmem:[%s0 + $0x1c0] sm:$0xff]
    %v84 = vld [vmem:[%s0 + $0x1c8] sm:$0xff]
    %v85 = vld [vmem:[%s0 + $0x1d0] sm:$0xff]
    %v86 = vld [vmem:[%s0 + $0x1d8] sm:$0xff]
    %v87 = vld [vmem:[%s0 + $0x1e0] sm:$0xff]
    %v88 = vld [vmem:[%s0 + $0x1e8] sm:$0xff]
    %v89 = vld [vmem:[%s0 + $0x1f0] sm:$0xff]
    %v90 = vld [vmem:[%s0 + $0x1f8] sm:$0xff]
    %v91 = vld [vmem:[%s0 + $0x200] sm:$0xff]
    %v92 = vld [vmem:[%s0 + $0x208] sm:$0xff]
    %v93 = vld [vmem:[%s0 + $0x210] sm:$0xff]
    %v94 = vld [vmem:[%s0 + $0x218] sm:$0xff]
    %v95 = vld [vmem:[%s0 + $0x220] sm:$0xff]
    %v96 = vld [vmem:[%s0 + $0x228] sm:$0xff]
    %v97 = vld [vmem:[%s0 + $0x230] sm:$0xff]
    %v98 = vld [vmem:[%s0 + $0x238] sm:$0xff]
    %v99 = vld [vmem:[%s0 + $0x240] sm:$0xff]
    %v100 = vld [vmem:[%s0 + $0x248] sm:$0xff]
    %v101 = vld [vmem:[%s0 + $0x250] sm:$0xff]
    %v102 = vld [vmem:[%s0 + $0x258] sm:$0xff]
    %v103 = vld [vmem:[%s0 + $0x260] sm:$0xff]
    %v104 = vld [vmem:[%s0 + $0x268] sm:$0xff]
    %v105 = vld [vmem:[%s0 + $0x270] sm:$0xff]
    %v106 = vld [vmem:[%s0 + $0x278] sm:$0xff]
    %v107 = vld [vmem:[%s1] sm:$0xff]
    %v108 = vld [vmem:[%s1 + $0x8] sm:$0xff]
    %v109 = vld [vmem:[%s1 + $0x10] sm:$0xff]
    %v110 = vld [vmem:[%s1 + $0x18] sm:$0xff]
    %v111 = vld [vmem:[%s1 + $0x20] sm:$0xff]
    %v112 = vld [vmem:[%s1 + $0x28] sm:$0xff]
    %v113 = vld [vmem:[%s1 + $0x30] sm:$0xff]
    %v114 = vld [vmem:[%s1 + $0x38] sm:$0xff]
    %v115 = vld [vmem:[%s1 + $0x40] sm:$0xff]
    %v116 = vld [vmem:[%s1 + $0x48] sm:$0xff]
    %v117 = vld [vmem:[%s1 + $0x50] sm:$0xff]
    %v118 = vld [vmem:[%s1 + $0x58] sm:$0xff]
    %v119 = vld [vmem:[%s1 + $0x60] sm:$0xff]
    %v120 = vld [vmem:[%s1 + $0x68] sm:$0xff]
    %v121 = vld [vmem:[%s1 + $0x70] sm:$0xff]
    %v122 = vld [vmem:[%s1 + $0x78] sm:$0xff]
    %v123 = vld [vmem:[%s1 + $0x80] sm:$0xff]
    %v124 = vld [vmem:[%s1 + $0x88] sm:$0xff]
    %v125 = vld [vmem:[%s1 + $0x90] sm:$0xff]
    %v126 = vld [vmem:[%s1 + $0x98] sm:$0xff]
    %v127 = vld [vmem:[%s1 + $0xa0] sm:$0xff]
    %v128 = vld [vmem:[%s1 + $0xa8] sm:$0xff]
    %v129 = vld [vmem:[%s1 + $0xb0] sm:$0xff]
    %v130 = vld [vmem:[%s1 + $0xb8] sm:$0xff]
    %v131 = vld [vmem:[%s1 + $0xc0] sm:$0xff]
    %v132 = vld [vmem:[%s1 + $0xc8] sm:$0xff]
    %v133 = vld [vmem:[%s1 + $0xd0] sm:$0xff]
    %v134 = vld [vmem:[%s1 + $0xd8] sm:$0xff]
    %v135 = vld [vmem:[%s1 + $0xe0] sm:$0xff]
    %v136 = vld [vmem:[%s1 + $0xe8] sm:$0xff]
    %v137 = vld [vmem:[%s1 + $0xf0] sm:$0xff]
    %v138 = vld [vmem:[%s1 + $0xf8] sm:$0xff]
    %v139 = vld [vmem:[%s1 + $0x100] sm:$0xff]
    %v140 = vld [vmem:[%s1 + $0x108] sm:$0xff]
    %v141 = vld [vmem:[%s1 + $0x110] sm:$0xff]
    %v142 = vld [vmem:[%s1 + $0x118] sm:$0xff]
    %v143 = vld [vmem:[%s1 + $0x120] sm:$0xff]
    %v144 = vld [vmem:[%s1 + $0x128] sm:$0xff]
    %v145 = vld [vmem:[%s1 + $0x130] sm:$0xff]
    %v146 = vld [vmem:[%s1 + $0x138] sm:$0xff]
    %v147 = vld [vmem:[%s1 + $0x140] sm:$0xff]
    %v148 = vld [vmem:[%s1 + $0x148] sm:$0xff]
    %v149 = vld [vmem:[%s1 + $0x150] sm:$0xff]
    %v150 = vld [vmem:[%s1 + $0x158] sm:$0xff]
    %v151 = vld [vmem:[%s1 + $0x160] sm:$0xff]
    %v152 = vld [vmem:[%s1 + $0x168] sm:$0xff]
    %v153 = vld [vmem:[%s1 + $0x170] sm:$0xff]
    %v154 = vld [vmem:[%s1 + $0x178] sm:$0xff]
    %v155 = vld [vmem:[%s1 + $0x180] sm:$0xff]
    %v156 = vld [vmem:[%s1 + $0x188] sm:$0xff]
    %v157 = vld [vmem:[%s1 + $0x190] sm:$0xff]
    %v158 = vld [vmem:[%s1 + $0x198] sm:$0xff]
    %v159 = vld [vmem:[%s1 + $0x1a0] sm:$0xff]
    %v160 = vld [vmem:[%s1 + $0x1a8] sm:$0xff]
    %v161 = vld [vmem:[%s1 + $0x1b0] sm:$0xff]
    %v162 = vld [vmem:[%s1 + $0x1b8] sm:$0xff]
    %v163 = vld [vmem:[%s1 + $0x1c0] sm:$0xff]
    %v164 = vld [vmem:[%s1 + $0x1c8] sm:$0xff]
    %v165 = vld [vmem:[%s1 + $0x1d0] sm:$0xff]
    %v166 = vld [vmem:[%s1 + $0x1d8] sm:$0xff]
    %v167 = vld [vmem:[%s1 + $0x1e0] sm:$0xff]
    %v168 = vld [vmem:[%s1 + $0x1e8] sm:$0xff]
    %v169 = vld [vmem:[%s1 + $0x1f0] sm:$0xff]
    %v170 = vld [vmem:[%s1 + $0x1f8] sm:$0xff]
    %v171 = vld [vmem:[%s1 + $0x200] sm:$0xff]
    %v172 = vld [vmem:[%s1 + $0x208] sm:$0xff]
    %v173 = vld [vmem:[%s1 + $0x210] sm:$0xff]
    %v174 = vld [vmem:[%s1 + $0x218] sm:$0xff]
    %v175 = vld [vmem:[%s1 + $0x220] sm:$0xff]
    %v176 = vld [vmem:[%s1 + $0x228] sm:$0xff]
    %v177 = vld [vmem:[%s1 + $0x230] sm:$0xff]
    %v178 = vld [vmem:[%s1 + $0x238] sm:$0xff]
    %v179 = vld [vmem:[%s1 + $0x240] sm:$0xff]
    %v180 = vld [vmem:[%s1 + $0x248] sm:$0xff]
    %v181 = vld [vmem:[%s1 + $0x250] sm:$0xff]
    %v182 = vld [vmem:[%s1 + $0x258] sm:$0xff]
    %v183 = vld [vmem:[%s1 + $0x260] sm:$0xff]
    %v184 = vld [vmem:[%s1 + $0x268] sm:$0xff]
    %v185 = vld [vmem:[%s1 + $0x270] sm:$0xff]
    %v186 = vld [vmem:[%s1 + $0x278] sm:$0xff]
    %v187 = vld [vmem:[%s1 + $0x280] sm:$0xff]
    %v188 = vld [vmem:[%s1 + $0x288] sm:$0xff]
    %v189 = vld [vmem:[%s1 + $0x290] sm:$0xff]
    %v190 = vld [vmem:[%s1 + $0x298] sm:$0xff]
    %v191 = vld [vmem:[%s1 + $0x2a0] sm:$0xff]
    %v192 = vld [vmem:[%s1 + $0x2a8] sm:$0xff]
    %v193 = vld [vmem:[%s1 + $0x2b0] sm:$0xff]
    %v194 = vld [vmem:[%s1 + $0x2b8] sm:$0xff]
    %v195 = vld [vmem:[%s1 + $0x2c0] sm:$0xff]
    %v196 = vld [vmem:[%s1 + $0x2c8] sm:$0xff]
    %v197 = vld [vmem:[%s1 + $0x2d0] sm:$0xff]
    %v198 = vld [vmem:[%s1 + $0x2d8] sm:$0xff]
    %v199 = vld [vmem:[%s1 + $0x2e0] sm:$0xff]
    %v200 = vld [vmem:[%s1 + $0x2e8] sm:$0xff]
    %v201 = vld [vmem:[%s1 + $0x2f0] sm:$0xff]
    %v202 = vld [vmem:[%s1 + $0x2f8] sm:$0xff]
    %v203 = vld [vmem:[%s1 + $0x300] sm:$0xff]
    %v204 = vld [vmem:[%s1 + $0x308] sm:$0xff]
    %v205 = vld [vmem:[%s1 + $0x310] sm:$0xff]
    %v206 = vld [vmem:[%s1 + $0x318] sm:$0xff]
    %v207 = vld [vmem:[%s1 + $0x320] sm:$0xff]
    %v208 = vld [vmem:[%s1 + $0x328] sm:$0xff]
    %v209 = vld [vmem:[%s1 + $0x330] sm:$0xff]
    %v210 = vld [vmem:[%s1 + $0x338] sm:$0xff]
    %v211 = vld [vmem:[%s1 + $0x340] sm:$0xff]
    %v212 = vld [vmem:[%s1 + $0x348] sm:$0xff]
    %v213 = vld [vmem:[%s1 + $0x350] sm:$0xff]
    %v214 = vld [vmem:[%s1 + $0x358] sm:$0xff]
    %v215 = vld [vmem:[%s1 + $0x360] sm:$0xff]
    %v216 = vld [vmem:[%s1 + $0x368] sm:$0xff]
    %v217 = vld [vmem:[%s1 + $0x370] sm:$0xff]
    %v218 = vld [vmem:[%s1 + $0x378] sm:$0xff]
    %v219 = vld [vmem:[%s1 + $0x380] sm:$0xff]
    %v220 = vld [vmem:[%s1 + $0x388] sm:$0xff]
    %v221 = vld [vmem:[%s1 + $0x390] sm:$0xff]
    %v222 = vld [vmem:[%s1 + $0x398] sm:$0xff]
    %v223 = vld [vmem:[%s1 + $0x3a0] sm:$0xff]
    %v224 = vld [vmem:[%s1 + $0x3a8] sm:$0xff]
    %v225 = vld [vmem:[%s1 + $0x3b0] sm:$0xff]
    %v226 = vld [vmem:[%s1 + $0x3b8] sm:$0xff]
    %v227 = vld [vmem:[%s1 + $0x3c0] sm:$0xff]
    %v228 = vld [vmem:[%s1 + $0x3c8] sm:$0xff]
    %v229 = vld [vmem:[%s1 + $0x3d0] sm:$0xff]
    %v230 = vld [vmem:[%s1 + $0x3d8] sm:$0xff]
    %v231 = vld [vmem:[%s1 + $0x3e0] sm:$0xff]
    %v232 = vld [vmem:[%s1 + $0x3e8] sm:$0xff]
    %v233 = vld [vmem:[%s1 + $0x3f0] sm:$0xff]
    %v234 = vld [vmem:[%s1 + $0x3f8] sm:$0xff]
    %v235 = vld [vmem:[%s1 + $0x400] sm:$0xff]
    %v236 = vld [vmem:[%s1 + $0x408] sm:$0xff]
    %v237 = vld [vmem:[%s1 + $0x410] sm:$0xff]
    %v238 = vld [vmem:[%s1 + $0x418] sm:$0xff]
    %v239 = vld [vmem:[%s1 + $0x420] sm:$0xff]
    %v240 = vld [vmem:[%s1 + $0x428] sm:$0xff]
    %v241 = vld [vmem:[%s1 + $0x430] sm:$0xff]
    %v242 = vld [vmem:[%s1 + $0x438] sm:$0xff]
    %v243 = vld [vmem:[%s1 + $0x440] sm:$0xff]
    %v244 = vld [vmem:[%s1 + $0x448] sm:$0xff]
    %v245 = vld [vmem:[%s1 + $0x450] sm:$0xff]
    %v246 = vld [vmem:[%s1 + $0x458] sm:$0xff]
    %v247 = vld [vmem:[%s1 + $0x460] sm:$0xff]
    %v248 = vld [vmem:[%s1 + $0x468] sm:$0xff]
    %v249 = vld [vmem:[%s1 + $0x470] sm:$0xff]
    %v250 = vld [vmem:[%s1 + $0x478] sm:$0xff]
    %v251 = vld [vmem:[%s1 + $0x480] sm:$0xff]
    %v252 = vld [vmem:[%s1 + $0x488] sm:$0xff]
    %v253 = vld [vmem:[%s1 + $0x490] sm:$0xff]
    %v254 = vld [vmem:[%s1 + $0x498] sm:$0xff]
    %v255 = vld [vmem:[%s1 + $0x4a0] sm:$0xff]
    %v256 = vld [vmem:[%s1 + $0x4a8] sm:$0xff]
    %v257 = vld [vmem:[%s1 + $0x4b0] sm:$0xff]
    %v258 = vld [vmem:[%s1 + $0x4b8] sm:$0xff]
    %v259 = vld [vmem:[%s1 + $0x4c0] sm:$0xff]
    %v260 = vld [vmem:[%s1 + $0x4c8] sm:$0xff]
    %v261 = vld [vmem:[%s1 + $0x4d0] sm:$0xff]
    %v262 = vld [vmem:[%s1 + $0x4d8] sm:$0xff]
    %v263 = vld [vmem:[%s1 + $0x4e0] sm:$0xff]
    %v264 = vld [vmem:[%s1 + $0x4e8] sm:$0xff]
    %v265 = vld [vmem:[%s1 + $0x4f0] sm:$0xff]
    %v266 = vld [vmem:[%s1 + $0x4f8] sm:$0xff]
    %v267 = vld [vmem:[%s1 + $0x500] sm:$0xff]
    %v268 = vld [vmem:[%s1 + $0x508] sm:$0xff]
    %v269 = vld [vmem:[%s1 + $0x510] sm:$0xff]
    %v270 = vld [vmem:[%s1 + $0x518] sm:$0xff]
    %v271 = vld [vmem:[%s1 + $0x520] sm:$0xff]
    %v272 = vld [vmem:[%s1 + $0x528] sm:$0xff]
    %v273 = vld [vmem:[%s1 + $0x530] sm:$0xff]
    %v274 = vld [vmem:[%s1 + $0x538] sm:$0xff]
    %v275 = vld [vmem:[%s1 + $0x540] sm:$0xff]
    %v276 = vld [vmem:[%s1 + $0x548] sm:$0xff]
    %v277 = vld [vmem:[%s1 + $0x550] sm:$0xff]
    %v278 = vld [vmem:[%s1 + $0x558] sm:$0xff]
    %v279 = vld [vmem:[%s1 + $0x560] sm:$0xff]
    %v280 = vld [vmem:[%s1 + $0x568] sm:$0xff]
    %v281 = vld [vmem:[%s1 + $0x570] sm:$0xff]
    %v282 = vld [vmem:[%s1 + $0x578] sm:$0xff]
    %v283 = vld [vmem:[%s1 + $0x580] sm:$0xff]
    %v284 = vld [vmem:[%s1 + $0x588] sm:$0xff]
    %v285 = vld [vmem:[%s1 + $0x590] sm:$0xff]
    %v286 = vld [vmem:[%s1 + $0x598] sm:$0xff]
    %v287 = vld [vmem:[%s1 + $0x5a0] sm:$0xff]
    %v288 = vld [vmem:[%s1 + $0x5a8] sm:$0xff]
    %v289 = vld [vmem:[%s1 + $0x5b0] sm:$0xff]
    %v290 = vld [vmem:[%s1 + $0x5b8] sm:$0xff]
    %v291 = vld [vmem:[%s1 + $0x5c0] sm:$0xff]
    %v292 = vld [vmem:[%s1 + $0x5c8] sm:$0xff]
    %v293 = vld [vmem:[%s1 + $0x5d0] sm:$0xff]
    %v294 = vld [vmem:[%s1 + $0x5d8] sm:$0xff]
    %v295 = vld [vmem:[%s1 + $0x5e0] sm:$0xff]
    %v296 = vld [vmem:[%s1 + $0x5e8] sm:$0xff]
    %v297 = vld [vmem:[%s1 + $0x5f0] sm:$0xff]
    %v298 = vld [vmem:[%s1 + $0x5f8] sm:$0xff]
    %v299 = vld [vmem:[%s1 + $0x600] sm:$0xff]
    %v300 = vld [vmem:[%s1 + $0x608] sm:$0xff]
    %v301 = vld [vmem:[%s1 + $0x610] sm:$0xff]
    %v302 = vld [vmem:[%s1 + $0x618] sm:$0xff]
    %v303 = vld [vmem:[%s1 + $0x620] sm:$0xff]
    %v304 = vld [vmem:[%s1 + $0x628] sm:$0xff]
    %v305 = vld [vmem:[%s1 + $0x630] sm:$0xff]
    %v306 = vld [vmem:[%s1 + $0x638] sm:$0xff]
    %v307 = vld [vmem:[%s1 + $0x640] sm:$0xff]
    %v308 = vld [vmem:[%s1 + $0x648] sm:$0xff]
    %v309 = vld [vmem:[%s1 + $0x650] sm:$0xff]
    %v310 = vld [vmem:[%s1 + $0x658] sm:$0xff]
    %v311 = vld [vmem:[%s1 + $0x660] sm:$0xff]
    %v312 = vld [vmem:[%s1 + $0x668] sm:$0xff]
    %v313 = vld [vmem:[%s1 + $0x670] sm:$0xff]
    %v314 = vld [vmem:[%s1 + $0x678] sm:$0xff]
    %v315 = vld [vmem:[%s1 + $0x680] sm:$0xff]
    %v316 = vld [vmem:[%s1 + $0x688] sm:$0xff]
    %v317 = vld [vmem:[%s1 + $0x690] sm:$0xff]
    %v318 = vld [vmem:[%s1 + $0x698] sm:$0xff]
    %v319 = vld [vmem:[%s1 + $0x6a0] sm:$0xff]
    %v320 = vld [vmem:[%s1 + $0x6a8] sm:$0xff]
    %v321 = vld [vmem:[%s1 + $0x6b0] sm:$0xff]
    %v322 = vld [vmem:[%s1 + $0x6b8] sm:$0xff]
    %v323 = vld [vmem:[%s1 + $0x6c0] sm:$0xff]
    %v324 = vld [vmem:[%s1 + $0x6c8] sm:$0xff]
    %v325 = vld [vmem:[%s1 + $0x6d0] sm:$0xff]
    %v326 = vld [vmem:[%s1 + $0x6d8] sm:$0xff]
    %v327 = vld [vmem:[%s1 + $0x6e0] sm:$0xff]
    %v328 = vld [vmem:[%s1 + $0x6e8] sm:$0xff]
    %v329 = vld [vmem:[%s1 + $0x6f0] sm:$0xff]
    %v330 = vld [vmem:[%s1 + $0x6f8] sm:$0xff]
    %v331 = vld [vmem:[%s1 + $0x700] sm:$0xff]
    %v332 = vld [vmem:[%s1 + $0x708] sm:$0xff]
    %v333 = vld [vmem:[%s1 + $0x710] sm:$0xff]
    %v334 = vld [vmem:[%s1 + $0x718] sm:$0xff]
    %v335 = vld [vmem:[%s1 + $0x720] sm:$0xff]
    %v336 = vld [vmem:[%s1 + $0x728] sm:$0xff]
    %v337 = vld [vmem:[%s1 + $0x730] sm:$0xff]
    %v338 = vld [vmem:[%s1 + $0x738] sm:$0xff]
    %v339 = vld [vmem:[%s1 + $0x740] sm:$0xff]
    %v340 = vld [vmem:[%s1 + $0x748] sm:$0xff]
    %v341 = vld [vmem:[%s1 + $0x750] sm:$0xff]
    %v342 = vld [vmem:[%s1 + $0x758] sm:$0xff]
    %v343 = vld [vmem:[%s1 + $0x760] sm:$0xff]
    %v344 = vld [vmem:[%s1 + $0x768] sm:$0xff]
    %v345 = vld [vmem:[%s1 + $0x770] sm:$0xff]
    %v346 = vld [vmem:[%s1 + $0x778] sm:$0xff]
    %v347 = vld [vmem:[%s1 + $0x780] sm:$0xff]
    %v348 = vld [vmem:[%s1 + $0x788] sm:$0xff]
    %v349 = vld [vmem:[%s1 + $0x790] sm:$0xff]
    %v350 = vld [vmem:[%s1 + $0x798] sm:$0xff]
    %v351 = vld [vmem:[%s1 + $0x7a0] sm:$0xff]
    %v352 = vld [vmem:[%s1 + $0x7a8] sm:$0xff]
    %v353 = vld [vmem:[%s1 + $0x7b0] sm:$0xff]
    %v354 = vld [vmem:[%s1 + $0x7b8] sm:$0xff]
    %v355 = vld [vmem:[%s1 + $0x7c0] sm:$0xff]
    %v356 = vld [vmem:[%s1 + $0x7c8] sm:$0xff]
    %v357 = vld [vmem:[%s2] sm:$0x1]
    %v359 = vperm.slane %v357, 0
    %vm361 = vcmask 654336
    %v363 = vsel %vm361, %v42, 0
    %v366 = vsel %vm361, %v58, 0
    %v369 = vsel %vm361, %v74, 0
    %v372 = vsel %vm361, %v90, 0
    %v375 = vsel %vm361, %v106, 0
    %377 = vmatpush.msra.mxu0 %v122
    %378 = vmatpush.msra.mxu0 %v121
    %379 = vmatpush.msra.mxu0 %v120
    %380 = vmatpush.msra.mxu0 %v119
    %381 = vmatpush.msra.mxu0 %v118
    %382 = vmatpush.msra.mxu0 %v117
    %383 = vmatpush.msra.mxu0 %v116
    %384 = vmatpush.msra.mxu0 %v115
    %385 = vmatpush.msra.mxu0 %v114
    %386 = vmatpush.msra.mxu0 %v113
    %387 = vmatpush.msra.mxu0 %v112
    %388 = vmatpush.msra.mxu0 %v111
    %389 = vmatpush.msra.mxu0 %v110
    %390 = vmatpush.msra.mxu0 %v109
    %391 = vmatpush.msra.mxu0 %v108
    %392 = vmatpush.msra.mxu0 %v107
    %393 = vmatmul.f32.gmra.mxu0 %v27
    %v394 = vpop.f32.mrf.mxu0
    %v395 = vadd.f32 %v359, %v394
    %396 = vmatmul.f32.gmra.mxu0 %v43
    %v397 = vpop.f32.mrf.mxu0
    %v398 = vadd.f32 %v359, %v397
    %399 = vmatmul.f32.gmra.mxu0 %v59
    %v400 = vpop.f32.mrf.mxu0
    %v401 = vadd.f32 %v359, %v400
    %402 = vmatmul.f32.gmra.mxu0 %v75
    %v403 = vpop.f32.mrf.mxu0
    %v404 = vadd.f32 %v359, %v403
    %405 = vmatmul.f32.gmra.mxu0 %v91
    %v406 = vpop.f32.mrf.mxu0
    %v407 = vadd.f32 %v359, %v406
    %408 = vdwg.mxu0
    %409 = vmatpush.msra.mxu0 %v138
    %410 = vmatpush.msra.mxu0 %v137
    %411 = vmatpush.msra.mxu0 %v136
    %412 = vmatpush.msra.mxu0 %v135
    %413 = vmatpush.msra.mxu0 %v134
    %414 = vmatpush.msra.mxu0 %v133
    %415 = vmatpush.msra.mxu0 %v132
    %416 = vmatpush.msra.mxu0 %v131
    %417 = vmatpush.msra.mxu0 %v130
    %418 = vmatpush.msra.mxu0 %v129
    %419 = vmatpush.msra.mxu0 %v128
    %420 = vmatpush.msra.mxu0 %v127
    %421 = vmatpush.msra.mxu0 %v126
    %422 = vmatpush.msra.mxu0 %v125
    %423 = vmatpush.msra.mxu0 %v124
    %424 = vmatpush.msra.mxu0 %v123
    %425 = vmatmul.f32.gmra.mxu0 %v28
    %v426 = vpop.f32.mrf.mxu0
    %v427 = vadd.f32 %v395, %v426
    %428 = vmatmul.f32.gmra.mxu0 %v44
    %v429 = vpop.f32.mrf.mxu0
    %v430 = vadd.f32 %v398, %v429
    %431 = vmatmul.f32.gmra.mxu0 %v60
    %v432 = vpop.f32.mrf.mxu0
    %v433 = vadd.f32 %v401, %v432
    %434 = vmatmul.f32.gmra.mxu0 %v76
    %v435 = vpop.f32.mrf.mxu0
    %v436 = vadd.f32 %v404, %v435
    %437 = vmatmul.f32.gmra.mxu0 %v92
    %v438 = vpop.f32.mrf.mxu0
    %v439 = vadd.f32 %v407, %v438
    %440 = vdwg.mxu0
    %441 = vmatpush.msra.mxu0 %v154
    %442 = vmatpush.msra.mxu0 %v153
    %443 = vmatpush.msra.mxu0 %v152
    %444 = vmatpush.msra.mxu0 %v151
    %445 = vmatpush.msra.mxu0 %v150
    %446 = vmatpush.msra.mxu0 %v149
    %447 = vmatpush.msra.mxu0 %v148
    %448 = vmatpush.msra.mxu0 %v147
    %449 = vmatpush.msra.mxu0 %v146
    %450 = vmatpush.msra.mxu0 %v145
    %451 = vmatpush.msra.mxu0 %v144
    %452 = vmatpush.msra.mxu0 %v143
    %453 = vmatpush.msra.mxu0 %v142
    %454 = vmatpush.msra.mxu0 %v141
    %455 = vmatpush.msra.mxu0 %v140
    %456 = vmatpush.msra.mxu0 %v139
    %457 = vmatmul.f32.gmra.mxu0 %v29
    %v458 = vpop.f32.mrf.mxu0
    %v459 = vadd.f32 %v427, %v458
    %460 = vmatmul.f32.gmra.mxu0 %v45
    %v461 = vpop.f32.mrf.mxu0
    %v462 = vadd.f32 %v430, %v461
    %463 = vmatmul.f32.gmra.mxu0 %v61
    %v464 = vpop.f32.mrf.mxu0
    %v465 = vadd.f32 %v433, %v464
    %466 = vmatmul.f32.gmra.mxu0 %v77
    %v467 = vpop.f32.mrf.mxu0
    %v468 = vadd.f32 %v436, %v467
    %469 = vmatmul.f32.gmra.mxu0 %v93
    %v470 = vpop.f32.mrf.mxu0
    %v471 = vadd.f32 %v439, %v470
    %472 = vdwg.mxu0
    %473 = vmatpush.msra.mxu0 %v170
    %474 = vmatpush.msra.mxu0 %v169
    %475 = vmatpush.msra.mxu0 %v168
    %476 = vmatpush.msra.mxu0 %v167
    %477 = vmatpush.msra.mxu0 %v166
    %478 = vmatpush.msra.mxu0 %v165
    %479 = vmatpush.msra.mxu0 %v164
    %480 = vmatpush.msra.mxu0 %v163
    %481 = vmatpush.msra.mxu0 %v162
    %482 = vmatpush.msra.mxu0 %v161
    %483 = vmatpush.msra.mxu0 %v160
    %484 = vmatpush.msra.mxu0 %v159
    %485 = vmatpush.msra.mxu0 %v158
    %486 = vmatpush.msra.mxu0 %v157
    %487 = vmatpush.msra.mxu0 %v156
    %488 = vmatpush.msra.mxu0 %v155
    %489 = vmatmul.f32.gmra.mxu0 %v30
    %v490 = vpop.f32.mrf.mxu0
    %v491 = vadd.f32 %v459, %v490
    %492 = vmatmul.f32.gmra.mxu0 %v46
    %v493 = vpop.f32.mrf.mxu0
    %v494 = vadd.f32 %v462, %v493
    %495 = vmatmul.f32.gmra.mxu0 %v62
    %v496 = vpop.f32.mrf.mxu0
    %v497 = vadd.f32 %v465, %v496
    %498 = vmatmul.f32.gmra.mxu0 %v78
    %v499 = vpop.f32.mrf.mxu0
    %v500 = vadd.f32 %v468, %v499
    %501 = vmatmul.f32.gmra.mxu0 %v94
    %v502 = vpop.f32.mrf.mxu0
    %v503 = vadd.f32 %v471, %v502
    %504 = vdwg.mxu0
    %505 = vmatpush.msra.mxu0 %v186
    %506 = vmatpush.msra.mxu0 %v185
    %507 = vmatpush.msra.mxu0 %v184
    %508 = vmatpush.msra.mxu0 %v183
    %509 = vmatpush.msra.mxu0 %v182
    %510 = vmatpush.msra.mxu0 %v181
    %511 = vmatpush.msra.mxu0 %v180
    %512 = vmatpush.msra.mxu0 %v179
    %513 = vmatpush.msra.mxu0 %v178
    %514 = vmatpush.msra.mxu0 %v177
    %515 = vmatpush.msra.mxu0 %v176
    %516 = vmatpush.msra.mxu0 %v175
    %517 = vmatpush.msra.mxu0 %v174
    %518 = vmatpush.msra.mxu0 %v173
    %519 = vmatpush.msra.mxu0 %v172
    %520 = vmatpush.msra.mxu0 %v171
    %521 = vmatmul.f32.gmra.mxu0 %v31
    %v522 = vpop.f32.mrf.mxu0
    %v523 = vadd.f32 %v491, %v522
    %524 = vmatmul.f32.gmra.mxu0 %v47
    %v525 = vpop.f32.mrf.mxu0
    %v526 = vadd.f32 %v494, %v525
    %527 = vmatmul.f32.gmra.mxu0 %v63
    %v528 = vpop.f32.mrf.mxu0
    %v529 = vadd.f32 %v497, %v528
    %530 = vmatmul.f32.gmra.mxu0 %v79
    %v531 = vpop.f32.mrf.mxu0
    %v532 = vadd.f32 %v500, %v531
    %533 = vmatmul.f32.gmra.mxu0 %v95
    %v534 = vpop.f32.mrf.mxu0
    %v535 = vadd.f32 %v503, %v534
    %536 = vdwg.mxu0
    %537 = vmatpush.msra.mxu0 %v202
    %538 = vmatpush.msra.mxu0 %v201
    %539 = vmatpush.msra.mxu0 %v200
    %540 = vmatpush.msra.mxu0 %v199
    %541 = vmatpush.msra.mxu0 %v198
    %542 = vmatpush.msra.mxu0 %v197
    %543 = vmatpush.msra.mxu0 %v196
    %544 = vmatpush.msra.mxu0 %v195
    %545 = vmatpush.msra.mxu0 %v194
    %546 = vmatpush.msra.mxu0 %v193
    %547 = vmatpush.msra.mxu0 %v192
    %548 = vmatpush.msra.mxu0 %v191
    %549 = vmatpush.msra.mxu0 %v190
    %550 = vmatpush.msra.mxu0 %v189
    %551 = vmatpush.msra.mxu0 %v188
    %552 = vmatpush.msra.mxu0 %v187
    %553 = vmatmul.f32.gmra.mxu0 %v32
    %v554 = vpop.f32.mrf.mxu0
    %v555 = vadd.f32 %v523, %v554
    %556 = vmatmul.f32.gmra.mxu0 %v48
    %v557 = vpop.f32.mrf.mxu0
    %v558 = vadd.f32 %v526, %v557
    %559 = vmatmul.f32.gmra.mxu0 %v64
    %v560 = vpop.f32.mrf.mxu0
    %v561 = vadd.f32 %v529, %v560
    %562 = vmatmul.f32.gmra.mxu0 %v80
    %v563 = vpop.f32.mrf.mxu0
    %v564 = vadd.f32 %v532, %v563
    %565 = vmatmul.f32.gmra.mxu0 %v96
    %v566 = vpop.f32.mrf.mxu0
    %v567 = vadd.f32 %v535, %v566
    %568 = vdwg.mxu0
    %569 = vmatpush.msra.mxu0 %v218
    %570 = vmatpush.msra.mxu0 %v217
    %571 = vmatpush.msra.mxu0 %v216
    %572 = vmatpush.msra.mxu0 %v215
    %573 = vmatpush.msra.mxu0 %v214
    %574 = vmatpush.msra.mxu0 %v213
    %575 = vmatpush.msra.mxu0 %v212
    %576 = vmatpush.msra.mxu0 %v211
    %577 = vmatpush.msra.mxu0 %v210
    %578 = vmatpush.msra.mxu0 %v209
    %579 = vmatpush.msra.mxu0 %v208
    %580 = vmatpush.msra.mxu0 %v207
    %581 = vmatpush.msra.mxu0 %v206
    %582 = vmatpush.msra.mxu0 %v205
    %583 = vmatpush.msra.mxu0 %v204
    %584 = vmatpush.msra.mxu0 %v203
    %585 = vmatmul.f32.gmra.mxu0 %v33
    %v586 = vpop.f32.mrf.mxu0
    %v587 = vadd.f32 %v555, %v586
    %588 = vmatmul.f32.gmra.mxu0 %v49
    %v589 = vpop.f32.mrf.mxu0
    %v590 = vadd.f32 %v558, %v589
    %591 = vmatmul.f32.gmra.mxu0 %v65
    %v592 = vpop.f32.mrf.mxu0
    %v593 = vadd.f32 %v561, %v592
    %594 = vmatmul.f32.gmra.mxu0 %v81
    %v595 = vpop.f32.mrf.mxu0
    %v596 = vadd.f32 %v564, %v595
    %597 = vmatmul.f32.gmra.mxu0 %v97
    %v598 = vpop.f32.mrf.mxu0
    %v599 = vadd.f32 %v567, %v598
    %600 = vdwg.mxu0
    %601 = vmatpush.msra.mxu0 %v234
    %602 = vmatpush.msra.mxu0 %v233
    %603 = vmatpush.msra.mxu0 %v232
    %604 = vmatpush.msra.mxu0 %v231
    %605 = vmatpush.msra.mxu0 %v230
    %606 = vmatpush.msra.mxu0 %v229
    %607 = vmatpush.msra.mxu0 %v228
    %608 = vmatpush.msra.mxu0 %v227
    %609 = vmatpush.msra.mxu0 %v226
    %610 = vmatpush.msra.mxu0 %v225
    %611 = vmatpush.msra.mxu0 %v224
    %612 = vmatpush.msra.mxu0 %v223
    %613 = vmatpush.msra.mxu0 %v222
    %614 = vmatpush.msra.mxu0 %v221
    %615 = vmatpush.msra.mxu0 %v220
    %616 = vmatpush.msra.mxu0 %v219
    %617 = vmatmul.f32.gmra.mxu0 %v34
    %v618 = vpop.f32.mrf.mxu0
    %v619 = vadd.f32 %v587, %v618
    %620 = vmatmul.f32.gmra.mxu0 %v50
    %v621 = vpop.f32.mrf.mxu0
    %v622 = vadd.f32 %v590, %v621
    %623 = vmatmul.f32.gmra.mxu0 %v66
    %v624 = vpop.f32.mrf.mxu0
    %v625 = vadd.f32 %v593, %v624
    %626 = vmatmul.f32.gmra.mxu0 %v82
    %v627 = vpop.f32.mrf.mxu0
    %v628 = vadd.f32 %v596, %v627
    %629 = vmatmul.f32.gmra.mxu0 %v98
    %v630 = vpop.f32.mrf.mxu0
    %v631 = vadd.f32 %v599, %v630
    %632 = vdwg.mxu0
    %633 = vmatpush.msra.mxu0 %v250
    %634 = vmatpush.msra.mxu0 %v249
    %635 = vmatpush.msra.mxu0 %v248
    %636 = vmatpush.msra.mxu0 %v247
    %637 = vmatpush.msra.mxu0 %v246
    %638 = vmatpush.msra.mxu0 %v245
    %639 = vmatpush.msra.mxu0 %v244
    %640 = vmatpush.msra.mxu0 %v243
    %641 = vmatpush.msra.mxu0 %v242
    %642 = vmatpush.msra.mxu0 %v241
    %643 = vmatpush.msra.mxu0 %v240
    %644 = vmatpush.msra.mxu0 %v239
    %645 = vmatpush.msra.mxu0 %v238
    %646 = vmatpush.msra.mxu0 %v237
    %647 = vmatpush.msra.mxu0 %v236
    %648 = vmatpush.msra.mxu0 %v235
    %649 = vmatmul.f32.gmra.mxu0 %v35
    %v650 = vpop.f32.mrf.mxu0
    %v651 = vadd.f32 %v619, %v650
    %652 = vmatmul.f32.gmra.mxu0 %v51
    %v653 = vpop.f32.mrf.mxu0
    %v654 = vadd.f32 %v622, %v653
    %655 = vmatmul.f32.gmra.mxu0 %v67
    %v656 = vpop.f32.mrf.mxu0
    %v657 = vadd.f32 %v625, %v656
    %658 = vmatmul.f32.gmra.mxu0 %v83
    %v659 = vpop.f32.mrf.mxu0
    %v660 = vadd.f32 %v628, %v659
    %661 = vmatmul.f32.gmra.mxu0 %v99
    %v662 = vpop.f32.mrf.mxu0
    %v663 = vadd.f32 %v631, %v662
    %664 = vdwg.mxu0
    %665 = vmatpush.msra.mxu0 %v266
    %666 = vmatpush.msra.mxu0 %v265
    %667 = vmatpush.msra.mxu0 %v264
    %668 = vmatpush.msra.mxu0 %v263
    %669 = vmatpush.msra.mxu0 %v262
    %670 = vmatpush.msra.mxu0 %v261
    %671 = vmatpush.msra.mxu0 %v260
    %672 = vmatpush.msra.mxu0 %v259
    %673 = vmatpush.msra.mxu0 %v258
    %674 = vmatpush.msra.mxu0 %v257
    %675 = vmatpush.msra.mxu0 %v256
    %676 = vmatpush.msra.mxu0 %v255
    %677 = vmatpush.msra.mxu0 %v254
    %678 = vmatpush.msra.mxu0 %v253
    %679 = vmatpush.msra.mxu0 %v252
    %680 = vmatpush.msra.mxu0 %v251
    %681 = vmatmul.f32.gmra.mxu0 %v36
    %v682 = vpop.f32.mrf.mxu0
    %v683 = vadd.f32 %v651, %v682
    %684 = vmatmul.f32.gmra.mxu0 %v52
    %v685 = vpop.f32.mrf.mxu0
    %v686 = vadd.f32 %v654, %v685
    %687 = vmatmul.f32.gmra.mxu0 %v68
    %v688 = vpop.f32.mrf.mxu0
    %v689 = vadd.f32 %v657, %v688
    %690 = vmatmul.f32.gmra.mxu0 %v84
    %v691 = vpop.f32.mrf.mxu0
    %v692 = vadd.f32 %v660, %v691
    %693 = vmatmul.f32.gmra.mxu0 %v100
    %v694 = vpop.f32.mrf.mxu0
    %v695 = vadd.f32 %v663, %v694
    %696 = vdwg.mxu0
    %697 = vmatpush.msra.mxu0 %v282
    %698 = vmatpush.msra.mxu0 %v281
    %699 = vmatpush.msra.mxu0 %v280
    %700 = vmatpush.msra.mxu0 %v279
    %701 = vmatpush.msra.mxu0 %v278
    %702 = vmatpush.msra.mxu0 %v277
    %703 = vmatpush.msra.mxu0 %v276
    %704 = vmatpush.msra.mxu0 %v275
    %705 = vmatpush.msra.mxu0 %v274
    %706 = vmatpush.msra.mxu0 %v273
    %707 = vmatpush.msra.mxu0 %v272
    %708 = vmatpush.msra.mxu0 %v271
    %709 = vmatpush.msra.mxu0 %v270
    %710 = vmatpush.msra.mxu0 %v269
    %711 = vmatpush.msra.mxu0 %v268
    %712 = vmatpush.msra.mxu0 %v267
    %713 = vmatmul.f32.gmra.mxu0 %v37
    %v714 = vpop.f32.mrf.mxu0
    %v715 = vadd.f32 %v683, %v714
    %716 = vmatmul.f32.gmra.mxu0 %v53
    %v717 = vpop.f32.mrf.mxu0
    %v718 = vadd.f32 %v686, %v717
    %719 = vmatmul.f32.gmra.mxu0 %v69
    %v720 = vpop.f32.mrf.mxu0
    %v721 = vadd.f32 %v689, %v720
    %722 = vmatmul.f32.gmra.mxu0 %v85
    %v723 = vpop.f32.mrf.mxu0
    %v724 = vadd.f32 %v692, %v723
    %725 = vmatmul.f32.gmra.mxu0 %v101
    %v726 = vpop.f32.mrf.mxu0
    %v727 = vadd.f32 %v695, %v726
    %728 = vdwg.mxu0
    %729 = vmatpush.msra.mxu0 %v298
    %730 = vmatpush.msra.mxu0 %v297
    %731 = vmatpush.msra.mxu0 %v296
    %732 = vmatpush.msra.mxu0 %v295
    %733 = vmatpush.msra.mxu0 %v294
    %734 = vmatpush.msra.mxu0 %v293
    %735 = vmatpush.msra.mxu0 %v292
    %736 = vmatpush.msra.mxu0 %v291
    %737 = vmatpush.msra.mxu0 %v290
    %738 = vmatpush.msra.mxu0 %v289
    %739 = vmatpush.msra.mxu0 %v288
    %740 = vmatpush.msra.mxu0 %v287
    %741 = vmatpush.msra.mxu0 %v286
    %742 = vmatpush.msra.mxu0 %v285
    %743 = vmatpush.msra.mxu0 %v284
    %744 = vmatpush.msra.mxu0 %v283
    %745 = vmatmul.f32.gmra.mxu0 %v38
    %v746 = vpop.f32.mrf.mxu0
    %v747 = vadd.f32 %v715, %v746
    %748 = vmatmul.f32.gmra.mxu0 %v54
    %v749 = vpop.f32.mrf.mxu0
    %v750 = vadd.f32 %v718, %v749
    %751 = vmatmul.f32.gmra.mxu0 %v70
    %v752 = vpop.f32.mrf.mxu0
    %v753 = vadd.f32 %v721, %v752
    %754 = vmatmul.f32.gmra.mxu0 %v86
    %v755 = vpop.f32.mrf.mxu0
    %v756 = vadd.f32 %v724, %v755
    %757 = vmatmul.f32.gmra.mxu0 %v102
    %v758 = vpop.f32.mrf.mxu0
    %v759 = vadd.f32 %v727, %v758
    %760 = vdwg.mxu0
    %761 = vmatpush.msra.mxu0 %v314
    %762 = vmatpush.msra.mxu0 %v313
    %763 = vmatpush.msra.mxu0 %v312
    %764 = vmatpush.msra.mxu0 %v311
    %765 = vmatpush.msra.mxu0 %v310
    %766 = vmatpush.msra.mxu0 %v309
    %767 = vmatpush.msra.mxu0 %v308
    %768 = vmatpush.msra.mxu0 %v307
    %769 = vmatpush.msra.mxu0 %v306
    %770 = vmatpush.msra.mxu0 %v305
    %771 = vmatpush.msra.mxu0 %v304
    %772 = vmatpush.msra.mxu0 %v303
    %773 = vmatpush.msra.mxu0 %v302
    %774 = vmatpush.msra.mxu0 %v301
    %775 = vmatpush.msra.mxu0 %v300
    %776 = vmatpush.msra.mxu0 %v299
    %777 = vmatmul.f32.gmra.mxu0 %v39
    %v778 = vpop.f32.mrf.mxu0
    %v779 = vadd.f32 %v747, %v778
    %780 = vmatmul.f32.gmra.mxu0 %v55
    %v781 = vpop.f32.mrf.mxu0
    %v782 = vadd.f32 %v750, %v781
    %783 = vmatmul.f32.gmra.mxu0 %v71
    %v784 = vpop.f32.mrf.mxu0
    %v785 = vadd.f32 %v753, %v784
    %786 = vmatmul.f32.gmra.mxu0 %v87
    %v787 = vpop.f32.mrf.mxu0
    %v788 = vadd.f32 %v756, %v787
    %789 = vmatmul.f32.gmra.mxu0 %v103
    %v790 = vpop.f32.mrf.mxu0
    %v791 = vadd.f32 %v759, %v790
    %792 = vdwg.mxu0
    %793 = vmatpush.msra.mxu0 %v330
    %794 = vmatpush.msra.mxu0 %v329
    %795 = vmatpush.msra.mxu0 %v328
    %796 = vmatpush.msra.mxu0 %v327
    %797 = vmatpush.msra.mxu0 %v326
    %798 = vmatpush.msra.mxu0 %v325
    %799 = vmatpush.msra.mxu0 %v324
    %800 = vmatpush.msra.mxu0 %v323
    %801 = vmatpush.msra.mxu0 %v322
    %802 = vmatpush.msra.mxu0 %v321
    %803 = vmatpush.msra.mxu0 %v320
    %804 = vmatpush.msra.mxu0 %v319
    %805 = vmatpush.msra.mxu0 %v318
    %806 = vmatpush.msra.mxu0 %v317
    %807 = vmatpush.msra.mxu0 %v316
    %808 = vmatpush.msra.mxu0 %v315
    %809 = vmatmul.f32.gmra.mxu0 %v40
    %v810 = vpop.f32.mrf.mxu0
    %v811 = vadd.f32 %v779, %v810
    %812 = vmatmul.f32.gmra.mxu0 %v56
    %v813 = vpop.f32.mrf.mxu0
    %v814 = vadd.f32 %v782, %v813
    %815 = vmatmul.f32.gmra.mxu0 %v72
    %v816 = vpop.f32.mrf.mxu0
    %v817 = vadd.f32 %v785, %v816
    %818 = vmatmul.f32.gmra.mxu0 %v88
    %v819 = vpop.f32.mrf.mxu0
    %v820 = vadd.f32 %v788, %v819
    %821 = vmatmul.f32.gmra.mxu0 %v104
    %v822 = vpop.f32.mrf.mxu0
    %v823 = vadd.f32 %v791, %v822
    %824 = vdwg.mxu0
    %825 = vmatpush.msra.mxu0 %v346
    %826 = vmatpush.msra.mxu0 %v345
    %827 = vmatpush.msra.mxu0 %v344
    %828 = vmatpush.msra.mxu0 %v343
    %829 = vmatpush.msra.mxu0 %v342
    %830 = vmatpush.msra.mxu0 %v341
    %831 = vmatpush.msra.mxu0 %v340
    %832 = vmatpush.msra.mxu0 %v339
    %833 = vmatpush.msra.mxu0 %v338
    %834 = vmatpush.msra.mxu0 %v337
    %835 = vmatpush.msra.mxu0 %v336
    %836 = vmatpush.msra.mxu0 %v335
    %837 = vmatpush.msra.mxu0 %v334
    %838 = vmatpush.msra.mxu0 %v333
    %839 = vmatpush.msra.mxu0 %v332
    %840 = vmatpush.msra.mxu0 %v331
    %841 = vmatmul.f32.gmra.mxu0 %v41
    %v842 = vpop.f32.mrf.mxu0
    %v843 = vadd.f32 %v811, %v842
    %844 = vmatmul.f32.gmra.mxu0 %v57
    %v845 = vpop.f32.mrf.mxu0
    %v846 = vadd.f32 %v814, %v845
    %847 = vmatmul.f32.gmra.mxu0 %v73
    %v848 = vpop.f32.mrf.mxu0
    %v849 = vadd.f32 %v817, %v848
    %850 = vmatmul.f32.gmra.mxu0 %v89
    %v851 = vpop.f32.mrf.mxu0
    %v852 = vadd.f32 %v820, %v851
    %853 = vmatmul.f32.gmra.mxu0 %v105
    %v854 = vpop.f32.mrf.mxu0
    %v855 = vadd.f32 %v823, %v854
    %856 = vdwg.mxu0
    %857 = vmatpush.msra.mxu0 0.0
    %858 = vmatpush.msra.mxu0 0.0
    %859 = vmatpush.msra.mxu0 0.0
    %860 = vmatpush.msra.mxu0 0.0
    %861 = vmatpush.msra.mxu0 0.0
    %862 = vmatpush.msra.mxu0 0.0
    %863 = vmatpush.msra.mxu0 %v356
    %864 = vmatpush.msra.mxu0 %v355
    %865 = vmatpush.msra.mxu0 %v354
    %866 = vmatpush.msra.mxu0 %v353
    %867 = vmatpush.msra.mxu0 %v352
    %868 = vmatpush.msra.mxu0 %v351
    %869 = vmatpush.msra.mxu0 %v350
    %870 = vmatpush.msra.mxu0 %v349
    %871 = vmatpush.msra.mxu0 %v348
    %872 = vmatpush.msra.mxu0 %v347
    %873 = vmatmul.f32.gmra.mxu0 %v363
    %v874 = vpop.f32.mrf.mxu0
    %v875 = vadd.f32 %v843, %v874
    %876 = vmatmul.f32.gmra.mxu0 %v366
    %v877 = vpop.f32.mrf.mxu0
    %v878 = vadd.f32 %v846, %v877
    %879 = vmatmul.f32.gmra.mxu0 %v369
    %v880 = vpop.f32.mrf.mxu0
    %v881 = vadd.f32 %v849, %v880
    %882 = vmatmul.f32.gmra.mxu0 %v372
    %v883 = vpop.f32.mrf.mxu0
    %v884 = vadd.f32 %v852, %v883
    %885 = vmatmul.f32.gmra.mxu0 %v375
    %v886 = vpop.f32.mrf.mxu0
    %v887 = vadd.f32 %v855, %v886
    %888 = vdwg.mxu0
    %v889 = vld [vmem:[%s4] sm:$0x1]
    %v891 = vperm.slane %v889, 0
    %v893 = vadd.f32 %v891, 0.0
    %v894 = vld [vmem:[%s3] sm:$0xff]
    %v895 = vld [vmem:[%s3 + $0x8] sm:$0x3]
    %vm896 = vcmask 80896
    %v898 = vsel %vm896, %v875, 0
    %vm900 = vcmask 1041408
    %v902 = vsel %vm900, %v895, 0
    %904 = vmatpush.msra.mxu0 0.0
    %905 = vmatpush.msra.mxu0 0.0
    %906 = vmatpush.msra.mxu0 0.0
    %907 = vmatpush.msra.mxu0 0.0
    %908 = vmatpush.msra.mxu0 0.0
    %909 = vmatpush.msra.mxu0 0.0
    %910 = vmatpush.msra.mxu0 0.0
    %911 = vmatpush.msra.mxu0 0.0
    %912 = vmatpush.msra.mxu0 0.0
    %913 = vmatpush.msra.mxu0 0.0
    %914 = vmatpush.msra.mxu0 0.0
    %915 = vmatpush.msra.mxu0 0.0
    %916 = vmatpush.msra.mxu0 0.0
    %917 = vmatpush.msra.mxu0 0.0
    %918 = vmatpush.msra.mxu0 %v902
    %919 = vmatpush.msra.mxu0 %v894
    %920 = vmatmul.f32.gmra.mxu0 %v898
    %v921 = vpop.f32.mrf.mxu0
    %v922 = vadd.f32 0.0, %v921
    %923 = vdwg.mxu0
    %v924 = vadd.f32 %v893, %v922
    %s925 = scalar_lea.vmem %s3, 16
    %v926 = vld [vmem:[%s925] sm:$0xff]
    %v927 = vld [vmem:[%s925 + $0x8] sm:$0x3]
    %v928 = vrot.slane %v875, 2
    %v929 = vsel %vm896, %v928, 0
    %v932 = vsel %vm900, %v927, 0
    %934 = vmatpush.msra.mxu0 0.0
    %935 = vmatpush.msra.mxu0 0.0
    %936 = vmatpush.msra.mxu0 0.0
    %937 = vmatpush.msra.mxu0 0.0
    %938 = vmatpush.msra.mxu0 0.0
    %939 = vmatpush.msra.mxu0 0.0
    %940 = vmatpush.msra.mxu0 0.0
    %941 = vmatpush.msra.mxu0 0.0
    %942 = vmatpush.msra.mxu0 0.0
    %943 = vmatpush.msra.mxu0 0.0
    %944 = vmatpush.msra.mxu0 0.0
    %945 = vmatpush.msra.mxu0 0.0
    %946 = vmatpush.msra.mxu0 0.0
    %947 = vmatpush.msra.mxu0 0.0
    %948 = vmatpush.msra.mxu0 %v932
    %949 = vmatpush.msra.mxu0 %v926
    %950 = vmatmul.f32.gmra.mxu0 %v929
    %v951 = vpop.f32.mrf.mxu0
    %v952 = vadd.f32 0.0, %v951
    %953 = vdwg.mxu0
    %v954 = vadd.f32 %v924, %v952
    %s955 = scalar_lea.vmem %s3, 32
    %v956 = vld [vmem:[%s955] sm:$0xff]
    %v957 = vld [vmem:[%s955 + $0x8] sm:$0x3]
    %v958 = vrot.slane %v875, 4
    %v959 = vsel %vm896, %v958, 0
    %v962 = vsel %vm900, %v957, 0
    %964 = vmatpush.msra.mxu0 0.0
    %965 = vmatpush.msra.mxu0 0.0
    %966 = vmatpush.msra.mxu0 0.0
    %967 = vmatpush.msra.mxu0 0.0
    %968 = vmatpush.msra.mxu0 0.0
    %969 = vmatpush.msra.mxu0 0.0
    %970 = vmatpush.msra.mxu0 0.0
    %971 = vmatpush.msra.mxu0 0.0
    %972 = vmatpush.msra.mxu0 0.0
    %973 = vmatpush.msra.mxu0 0.0
    %974 = vmatpush.msra.mxu0 0.0
    %975 = vmatpush.msra.mxu0 0.0
    %976 = vmatpush.msra.mxu0 0.0
    %977 = vmatpush.msra.mxu0 0.0
    %978 = vmatpush.msra.mxu0 %v962
    %979 = vmatpush.msra.mxu0 %v956
    %980 = vmatmul.f32.gmra.mxu0 %v959
    %v981 = vpop.f32.mrf.mxu0
    %v982 = vadd.f32 0.0, %v981
    %983 = vdwg.mxu0
    %v984 = vadd.f32 %v954, %v982
    %s985 = scalar_lea.vmem %s3, 48
    %v986 = vld [vmem:[%s985] sm:$0xff]
    %v987 = vld [vmem:[%s985 + $0x8] sm:$0x3]
    %v988 = vrot.slane %v875, 6
    %v989 = vsel %vm896, %v988, 0
    %v992 = vsel %vm900, %v987, 0
    %994 = vmatpush.msra.mxu0 0.0
    %995 = vmatpush.msra.mxu0 0.0
    %996 = vmatpush.msra.mxu0 0.0
    %997 = vmatpush.msra.mxu0 0.0
    %998 = vmatpush.msra.mxu0 0.0
    %999 = vmatpush.msra.mxu0 0.0
    %1000 = vmatpush.msra.mxu0 0.0
    %1001 = vmatpush.msra.mxu0 0.0
    %1002 = vmatpush.msra.mxu0 0.0
    %1003 = vmatpush.msra.mxu0 0.0
    %1004 = vmatpush.msra.mxu0 0.0
    %1005 = vmatpush.msra.mxu0 0.0
    %1006 = vmatpush.msra.mxu0 0.0
    %1007 = vmatpush.msra.mxu0 0.0
    %1008 = vmatpush.msra.mxu0 %v992
    %1009 = vmatpush.msra.mxu0 %v986
    %1010 = vmatmul.f32.gmra.mxu0 %v989
    %v1011 = vpop.f32.mrf.mxu0
    %v1012 = vadd.f32 0.0, %v1011
    %1013 = vdwg.mxu0
    %v1014 = vadd.f32 %v984, %v1012
    %s1015 = scalar_lea.vmem %s3, 64
    %v1016 = vld [vmem:[%s1015] sm:$0xff]
    %v1017 = vld [vmem:[%s1015 + $0x8] sm:$0x3]
    %v1019 = vsel %vm896, %v878, 0
    %v1022 = vsel %vm900, %v1017, 0
    %1024 = vmatpush.msra.mxu0 0.0
    %1025 = vmatpush.msra.mxu0 0.0
    %1026 = vmatpush.msra.mxu0 0.0
    %1027 = vmatpush.msra.mxu0 0.0
    %1028 = vmatpush.msra.mxu0 0.0
    %1029 = vmatpush.msra.mxu0 0.0
    %1030 = vmatpush.msra.mxu0 0.0
    %1031 = vmatpush.msra.mxu0 0.0
    %1032 = vmatpush.msra.mxu0 0.0
    %1033 = vmatpush.msra.mxu0 0.0
    %1034 = vmatpush.msra.mxu0 0.0
    %1035 = vmatpush.msra.mxu0 0.0
    %1036 = vmatpush.msra.mxu0 0.0
    %1037 = vmatpush.msra.mxu0 0.0
    %1038 = vmatpush.msra.mxu0 %v1022
    %1039 = vmatpush.msra.mxu0 %v1016
    %1040 = vmatmul.f32.gmra.mxu0 %v1019
    %v1041 = vpop.f32.mrf.mxu0
    %v1042 = vadd.f32 0.0, %v1041
    %1043 = vdwg.mxu0
    %v1044 = vadd.f32 %v1014, %v1042
    %s1045 = scalar_lea.vmem %s3, 80
    %v1046 = vld [vmem:[%s1045] sm:$0xff]
    %v1047 = vld [vmem:[%s1045 + $0x8] sm:$0x3]
    %v1048 = vrot.slane %v878, 2
    %v1049 = vsel %vm896, %v1048, 0
    %v1052 = vsel %vm900, %v1047, 0
    %1054 = vmatpush.msra.mxu0 0.0
    %1055 = vmatpush.msra.mxu0 0.0
    %1056 = vmatpush.msra.mxu0 0.0
    %1057 = vmatpush.msra.mxu0 0.0
    %1058 = vmatpush.msra.mxu0 0.0
    %1059 = vmatpush.msra.mxu0 0.0
    %1060 = vmatpush.msra.mxu0 0.0
    %1061 = vmatpush.msra.mxu0 0.0
    %1062 = vmatpush.msra.mxu0 0.0
    %1063 = vmatpush.msra.mxu0 0.0
    %1064 = vmatpush.msra.mxu0 0.0
    %1065 = vmatpush.msra.mxu0 0.0
    %1066 = vmatpush.msra.mxu0 0.0
    %1067 = vmatpush.msra.mxu0 0.0
    %1068 = vmatpush.msra.mxu0 %v1052
    %1069 = vmatpush.msra.mxu0 %v1046
    %1070 = vmatmul.f32.gmra.mxu0 %v1049
    %v1071 = vpop.f32.mrf.mxu0
    %v1072 = vadd.f32 0.0, %v1071
    %1073 = vdwg.mxu0
    %v1074 = vadd.f32 %v1044, %v1072
    %s1075 = scalar_lea.vmem %s3, 96
    %v1076 = vld [vmem:[%s1075] sm:$0xff]
    %v1077 = vld [vmem:[%s1075 + $0x8] sm:$0x3]
    %v1078 = vrot.slane %v878, 4
    %v1079 = vsel %vm896, %v1078, 0
    %v1082 = vsel %vm900, %v1077, 0
    %1084 = vmatpush.msra.mxu0 0.0
    %1085 = vmatpush.msra.mxu0 0.0
    %1086 = vmatpush.msra.mxu0 0.0
    %1087 = vmatpush.msra.mxu0 0.0
    %1088 = vmatpush.msra.mxu0 0.0
    %1089 = vmatpush.msra.mxu0 0.0
    %1090 = vmatpush.msra.mxu0 0.0
    %1091 = vmatpush.msra.mxu0 0.0
    %1092 = vmatpush.msra.mxu0 0.0
    %1093 = vmatpush.msra.mxu0 0.0
    %1094 = vmatpush.msra.mxu0 0.0
    %1095 = vmatpush.msra.mxu0 0.0
    %1096 = vmatpush.msra.mxu0 0.0
    %1097 = vmatpush.msra.mxu0 0.0
    %1098 = vmatpush.msra.mxu0 %v1082
    %1099 = vmatpush.msra.mxu0 %v1076
    %1100 = vmatmul.f32.gmra.mxu0 %v1079
    %v1101 = vpop.f32.mrf.mxu0
    %v1102 = vadd.f32 0.0, %v1101
    %1103 = vdwg.mxu0
    %v1104 = vadd.f32 %v1074, %v1102
    %s1105 = scalar_lea.vmem %s3, 112
    %v1106 = vld [vmem:[%s1105] sm:$0xff]
    %v1107 = vld [vmem:[%s1105 + $0x8] sm:$0x3]
    %v1108 = vrot.slane %v878, 6
    %v1109 = vsel %vm896, %v1108, 0
    %v1112 = vsel %vm900, %v1107, 0
    %1114 = vmatpush.msra.mxu0 0.0
    %1115 = vmatpush.msra.mxu0 0.0
    %1116 = vmatpush.msra.mxu0 0.0
    %1117 = vmatpush.msra.mxu0 0.0
    %1118 = vmatpush.msra.mxu0 0.0
    %1119 = vmatpush.msra.mxu0 0.0
    %1120 = vmatpush.msra.mxu0 0.0
    %1121 = vmatpush.msra.mxu0 0.0
    %1122 = vmatpush.msra.mxu0 0.0
    %1123 = vmatpush.msra.mxu0 0.0
    %1124 = vmatpush.msra.mxu0 0.0
    %1125 = vmatpush.msra.mxu0 0.0
    %1126 = vmatpush.msra.mxu0 0.0
    %1127 = vmatpush.msra.mxu0 0.0
    %1128 = vmatpush.msra.mxu0 %v1112
    %1129 = vmatpush.msra.mxu0 %v1106
    %1130 = vmatmul.f32.gmra.mxu0 %v1109
    %v1131 = vpop.f32.mrf.mxu0
    %v1132 = vadd.f32 0.0, %v1131
    %1133 = vdwg.mxu0
    %v1134 = vadd.f32 %v1104, %v1132
    %s1135 = scalar_lea.vmem %s3, 128
    %v1136 = vld [vmem:[%s1135] sm:$0xff]
    %v1137 = vld [vmem:[%s1135 + $0x8] sm:$0x3]
    %v1139 = vsel %vm896, %v881, 0
    %v1142 = vsel %vm900, %v1137, 0
    %1144 = vmatpush.msra.mxu0 0.0
    %1145 = vmatpush.msra.mxu0 0.0
    %1146 = vmatpush.msra.mxu0 0.0
    %1147 = vmatpush.msra.mxu0 0.0
    %1148 = vmatpush.msra.mxu0 0.0
    %1149 = vmatpush.msra.mxu0 0.0
    %1150 = vmatpush.msra.mxu0 0.0
    %1151 = vmatpush.msra.mxu0 0.0
    %1152 = vmatpush.msra.mxu0 0.0
    %1153 = vmatpush.msra.mxu0 0.0
    %1154 = vmatpush.msra.mxu0 0.0
    %1155 = vmatpush.msra.mxu0 0.0
    %1156 = vmatpush.msra.mxu0 0.0
    %1157 = vmatpush.msra.mxu0 0.0
    %1158 = vmatpush.msra.mxu0 %v1142
    %1159 = vmatpush.msra.mxu0 %v1136
    %1160 = vmatmul.f32.gmra.mxu0 %v1139
    %v1161 = vpop.f32.mrf.mxu0
    %v1162 = vadd.f32 0.0, %v1161
    %1163 = vdwg.mxu0
    %v1164 = vadd.f32 %v1134, %v1162
    %s1165 = scalar_lea.vmem %s3, 144
    %v1166 = vld [vmem:[%s1165] sm:$0xff]
    %v1167 = vld [vmem:[%s1165 + $0x8] sm:$0x3]
    %v1168 = vrot.slane %v881, 2
    %v1169 = vsel %vm896, %v1168, 0
    %v1172 = vsel %vm900, %v1167, 0
    %1174 = vmatpush.msra.mxu0 0.0
    %1175 = vmatpush.msra.mxu0 0.0
    %1176 = vmatpush.msra.mxu0 0.0
    %1177 = vmatpush.msra.mxu0 0.0
    %1178 = vmatpush.msra.mxu0 0.0
    %1179 = vmatpush.msra.mxu0 0.0
    %1180 = vmatpush.msra.mxu0 0.0
    %1181 = vmatpush.msra.mxu0 0.0
    %1182 = vmatpush.msra.mxu0 0.0
    %1183 = vmatpush.msra.mxu0 0.0
    %1184 = vmatpush.msra.mxu0 0.0
    %1185 = vmatpush.msra.mxu0 0.0
    %1186 = vmatpush.msra.mxu0 0.0
    %1187 = vmatpush.msra.mxu0 0.0
    %1188 = vmatpush.msra.mxu0 %v1172
    %1189 = vmatpush.msra.mxu0 %v1166
    %1190 = vmatmul.f32.gmra.mxu0 %v1169
    %v1191 = vpop.f32.mrf.mxu0
    %v1192 = vadd.f32 0.0, %v1191
    %1193 = vdwg.mxu0
    %v1194 = vadd.f32 %v1164, %v1192
    %s1195 = scalar_lea.vmem %s3, 160
    %v1196 = vld [vmem:[%s1195] sm:$0xff]
    %v1197 = vld [vmem:[%s1195 + $0x8] sm:$0x3]
    %v1198 = vrot.slane %v881, 4
    %v1199 = vsel %vm896, %v1198, 0
    %v1202 = vsel %vm900, %v1197, 0
    %1204 = vmatpush.msra.mxu0 0.0
    %1205 = vmatpush.msra.mxu0 0.0
    %1206 = vmatpush.msra.mxu0 0.0
    %1207 = vmatpush.msra.mxu0 0.0
    %1208 = vmatpush.msra.mxu0 0.0
    %1209 = vmatpush.msra.mxu0 0.0
    %1210 = vmatpush.msra.mxu0 0.0
    %1211 = vmatpush.msra.mxu0 0.0
    %1212 = vmatpush.msra.mxu0 0.0
    %1213 = vmatpush.msra.mxu0 0.0
    %1214 = vmatpush.msra.mxu0 0.0
    %1215 = vmatpush.msra.mxu0 0.0
    %1216 = vmatpush.msra.mxu0 0.0
    %1217 = vmatpush.msra.mxu0 0.0
    %1218 = vmatpush.msra.mxu0 %v1202
    %1219 = vmatpush.msra.mxu0 %v1196
    %1220 = vmatmul.f32.gmra.mxu0 %v1199
    %v1221 = vpop.f32.mrf.mxu0
    %v1222 = vadd.f32 0.0, %v1221
    %1223 = vdwg.mxu0
    %v1224 = vadd.f32 %v1194, %v1222
    %s1225 = scalar_lea.vmem %s3, 176
    %v1226 = vld [vmem:[%s1225] sm:$0xff]
    %v1227 = vld [vmem:[%s1225 + $0x8] sm:$0x3]
    %v1228 = vrot.slane %v881, 6
    %v1229 = vsel %vm896, %v1228, 0
    %v1232 = vsel %vm900, %v1227, 0
    %1234 = vmatpush.msra.mxu0 0.0
    %1235 = vmatpush.msra.mxu0 0.0
    %1236 = vmatpush.msra.mxu0 0.0
    %1237 = vmatpush.msra.mxu0 0.0
    %1238 = vmatpush.msra.mxu0 0.0
    %1239 = vmatpush.msra.mxu0 0.0
    %1240 = vmatpush.msra.mxu0 0.0
    %1241 = vmatpush.msra.mxu0 0.0
    %1242 = vmatpush.msra.mxu0 0.0
    %1243 = vmatpush.msra.mxu0 0.0
    %1244 = vmatpush.msra.mxu0 0.0
    %1245 = vmatpush.msra.mxu0 0.0
    %1246 = vmatpush.msra.mxu0 0.0
    %1247 = vmatpush.msra.mxu0 0.0
    %1248 = vmatpush.msra.mxu0 %v1232
    %1249 = vmatpush.msra.mxu0 %v1226
    %1250 = vmatmul.f32.gmra.mxu0 %v1229
    %v1251 = vpop.f32.mrf.mxu0
    %v1252 = vadd.f32 0.0, %v1251
    %1253 = vdwg.mxu0
    %v1254 = vadd.f32 %v1224, %v1252
    %s1255 = scalar_lea.vmem %s3, 192
    %v1256 = vld [vmem:[%s1255] sm:$0xff]
    %v1257 = vld [vmem:[%s1255 + $0x8] sm:$0x3]
    %v1259 = vsel %vm896, %v884, 0
    %v1262 = vsel %vm900, %v1257, 0
    %1264 = vmatpush.msra.mxu0 0.0
    %1265 = vmatpush.msra.mxu0 0.0
    %1266 = vmatpush.msra.mxu0 0.0
    %1267 = vmatpush.msra.mxu0 0.0
    %1268 = vmatpush.msra.mxu0 0.0
    %1269 = vmatpush.msra.mxu0 0.0
    %1270 = vmatpush.msra.mxu0 0.0
    %1271 = vmatpush.msra.mxu0 0.0
    %1272 = vmatpush.msra.mxu0 0.0
    %1273 = vmatpush.msra.mxu0 0.0
    %1274 = vmatpush.msra.mxu0 0.0
    %1275 = vmatpush.msra.mxu0 0.0
    %1276 = vmatpush.msra.mxu0 0.0
    %1277 = vmatpush.msra.mxu0 0.0
    %1278 = vmatpush.msra.mxu0 %v1262
    %1279 = vmatpush.msra.mxu0 %v1256
    %1280 = vmatmul.f32.gmra.mxu0 %v1259
    %v1281 = vpop.f32.mrf.mxu0
    %v1282 = vadd.f32 0.0, %v1281
    %1283 = vdwg.mxu0
    %v1284 = vadd.f32 %v1254, %v1282
    %s1285 = scalar_lea.vmem %s3, 208
    %v1286 = vld [vmem:[%s1285] sm:$0xff]
    %v1287 = vld [vmem:[%s1285 + $0x8] sm:$0x3]
    %v1288 = vrot.slane %v884, 2
    %v1289 = vsel %vm896, %v1288, 0
    %v1292 = vsel %vm900, %v1287, 0
    %1294 = vmatpush.msra.mxu0 0.0
    %1295 = vmatpush.msra.mxu0 0.0
    %1296 = vmatpush.msra.mxu0 0.0
    %1297 = vmatpush.msra.mxu0 0.0
    %1298 = vmatpush.msra.mxu0 0.0
    %1299 = vmatpush.msra.mxu0 0.0
    %1300 = vmatpush.msra.mxu0 0.0
    %1301 = vmatpush.msra.mxu0 0.0
    %1302 = vmatpush.msra.mxu0 0.0
    %1303 = vmatpush.msra.mxu0 0.0
    %1304 = vmatpush.msra.mxu0 0.0
    %1305 = vmatpush.msra.mxu0 0.0
    %1306 = vmatpush.msra.mxu0 0.0
    %1307 = vmatpush.msra.mxu0 0.0
    %1308 = vmatpush.msra.mxu0 %v1292
    %1309 = vmatpush.msra.mxu0 %v1286
    %1310 = vmatmul.f32.gmra.mxu0 %v1289
    %v1311 = vpop.f32.mrf.mxu0
    %v1312 = vadd.f32 0.0, %v1311
    %1313 = vdwg.mxu0
    %v1314 = vadd.f32 %v1284, %v1312
    %s1315 = scalar_lea.vmem %s3, 224
    %v1316 = vld [vmem:[%s1315] sm:$0xff]
    %v1317 = vld [vmem:[%s1315 + $0x8] sm:$0x3]
    %v1318 = vrot.slane %v884, 4
    %v1319 = vsel %vm896, %v1318, 0
    %v1322 = vsel %vm900, %v1317, 0
    %1324 = vmatpush.msra.mxu0 0.0
    %1325 = vmatpush.msra.mxu0 0.0
    %1326 = vmatpush.msra.mxu0 0.0
    %1327 = vmatpush.msra.mxu0 0.0
    %1328 = vmatpush.msra.mxu0 0.0
    %1329 = vmatpush.msra.mxu0 0.0
    %1330 = vmatpush.msra.mxu0 0.0
    %1331 = vmatpush.msra.mxu0 0.0
    %1332 = vmatpush.msra.mxu0 0.0
    %1333 = vmatpush.msra.mxu0 0.0
    %1334 = vmatpush.msra.mxu0 0.0
    %1335 = vmatpush.msra.mxu0 0.0
    %1336 = vmatpush.msra.mxu0 0.0
    %1337 = vmatpush.msra.mxu0 0.0
    %1338 = vmatpush.msra.mxu0 %v1322
    %1339 = vmatpush.msra.mxu0 %v1316
    %1340 = vmatmul.f32.gmra.mxu0 %v1319
    %v1341 = vpop.f32.mrf.mxu0
    %v1342 = vadd.f32 0.0, %v1341
    %1343 = vdwg.mxu0
    %v1344 = vadd.f32 %v1314, %v1342
    %s1345 = scalar_lea.vmem %s3, 240
    %v1346 = vld [vmem:[%s1345] sm:$0xff]
    %v1347 = vld [vmem:[%s1345 + $0x8] sm:$0x3]
    %v1348 = vrot.slane %v884, 6
    %v1349 = vsel %vm896, %v1348, 0
    %v1352 = vsel %vm900, %v1347, 0
    %1354 = vmatpush.msra.mxu0 0.0
    %1355 = vmatpush.msra.mxu0 0.0
    %1356 = vmatpush.msra.mxu0 0.0
    %1357 = vmatpush.msra.mxu0 0.0
    %1358 = vmatpush.msra.mxu0 0.0
    %1359 = vmatpush.msra.mxu0 0.0
    %1360 = vmatpush.msra.mxu0 0.0
    %1361 = vmatpush.msra.mxu0 0.0
    %1362 = vmatpush.msra.mxu0 0.0
    %1363 = vmatpush.msra.mxu0 0.0
    %1364 = vmatpush.msra.mxu0 0.0
    %1365 = vmatpush.msra.mxu0 0.0
    %1366 = vmatpush.msra.mxu0 0.0
    %1367 = vmatpush.msra.mxu0 0.0
    %1368 = vmatpush.msra.mxu0 %v1352
    %1369 = vmatpush.msra.mxu0 %v1346
    %1370 = vmatmul.f32.gmra.mxu0 %v1349
    %v1371 = vpop.f32.mrf.mxu0
    %v1372 = vadd.f32 0.0, %v1371
    %1373 = vdwg.mxu0
    %v1374 = vadd.f32 %v1344, %v1372
    %s1375 = scalar_lea.vmem %s3, 256
    %v1376 = vld [vmem:[%s1375] sm:$0xff]
    %v1377 = vld [vmem:[%s1375 + $0x8] sm:$0x3]
    %v1379 = vsel %vm896, %v887, 0
    %v1382 = vsel %vm900, %v1377, 0
    %1384 = vmatpush.msra.mxu0 0.0
    %1385 = vmatpush.msra.mxu0 0.0
    %1386 = vmatpush.msra.mxu0 0.0
    %1387 = vmatpush.msra.mxu0 0.0
    %1388 = vmatpush.msra.mxu0 0.0
    %1389 = vmatpush.msra.mxu0 0.0
    %1390 = vmatpush.msra.mxu0 0.0
    %1391 = vmatpush.msra.mxu0 0.0
    %1392 = vmatpush.msra.mxu0 0.0
    %1393 = vmatpush.msra.mxu0 0.0
    %1394 = vmatpush.msra.mxu0 0.0
    %1395 = vmatpush.msra.mxu0 0.0
    %1396 = vmatpush.msra.mxu0 0.0
    %1397 = vmatpush.msra.mxu0 0.0
    %1398 = vmatpush.msra.mxu0 %v1382
    %1399 = vmatpush.msra.mxu0 %v1376
    %1400 = vmatmul.f32.gmra.mxu0 %v1379
    %v1401 = vpop.f32.mrf.mxu0
    %v1402 = vadd.f32 0.0, %v1401
    %1403 = vdwg.mxu0
    %v1404 = vadd.f32 %v1374, %v1402
    %s1405 = scalar_lea.vmem %s3, 272
    %v1406 = vld [vmem:[%s1405] sm:$0xff]
    %v1407 = vld [vmem:[%s1405 + $0x8] sm:$0x3]
    %v1408 = vrot.slane %v887, 2
    %v1409 = vsel %vm896, %v1408, 0
    %v1412 = vsel %vm900, %v1407, 0
    %1414 = vmatpush.msra.mxu0 0.0
    %1415 = vmatpush.msra.mxu0 0.0
    %1416 = vmatpush.msra.mxu0 0.0
    %1417 = vmatpush.msra.mxu0 0.0
    %1418 = vmatpush.msra.mxu0 0.0
    %1419 = vmatpush.msra.mxu0 0.0
    %1420 = vmatpush.msra.mxu0 0.0
    %1421 = vmatpush.msra.mxu0 0.0
    %1422 = vmatpush.msra.mxu0 0.0
    %1423 = vmatpush.msra.mxu0 0.0
    %1424 = vmatpush.msra.mxu0 0.0
    %1425 = vmatpush.msra.mxu0 0.0
    %1426 = vmatpush.msra.mxu0 0.0
    %1427 = vmatpush.msra.mxu0 0.0
    %1428 = vmatpush.msra.mxu0 %v1412
    %1429 = vmatpush.msra.mxu0 %v1406
    %1430 = vmatmul.f32.gmra.mxu0 %v1409
    %v1431 = vpop.f32.mrf.mxu0
    %v1432 = vadd.f32 0.0, %v1431
    %1433 = vdwg.mxu0
    %v1434 = vadd.f32 %v1404, %v1432
    %s1435 = scalar_lea.vmem %s3, 288
    %v1436 = vld [vmem:[%s1435] sm:$0xff]
    %v1437 = vld [vmem:[%s1435 + $0x8] sm:$0x3]
    %v1438 = vrot.slane %v887, 4
    %v1439 = vsel %vm896, %v1438, 0
    %v1442 = vsel %vm900, %v1437, 0
    %1444 = vmatpush.msra.mxu0 0.0
    %1445 = vmatpush.msra.mxu0 0.0
    %1446 = vmatpush.msra.mxu0 0.0
    %1447 = vmatpush.msra.mxu0 0.0
    %1448 = vmatpush.msra.mxu0 0.0
    %1449 = vmatpush.msra.mxu0 0.0
    %1450 = vmatpush.msra.mxu0 0.0
    %1451 = vmatpush.msra.mxu0 0.0
    %1452 = vmatpush.msra.mxu0 0.0
    %1453 = vmatpush.msra.mxu0 0.0
    %1454 = vmatpush.msra.mxu0 0.0
    %1455 = vmatpush.msra.mxu0 0.0
    %1456 = vmatpush.msra.mxu0 0.0
    %1457 = vmatpush.msra.mxu0 0.0
    %1458 = vmatpush.msra.mxu0 %v1442
    %1459 = vmatpush.msra.mxu0 %v1436
    %1460 = vmatmul.f32.gmra.mxu0 %v1439
    %v1461 = vpop.f32.mrf.mxu0
    %v1462 = vadd.f32 0.0, %v1461
    %1463 = vdwg.mxu0
    %v1464 = vadd.f32 %v1434, %v1462
    %s1465 = scalar_lea.vmem %s3, 304
    %v1466 = vld [vmem:[%s1465] sm:$0xff]
    %v1467 = vld [vmem:[%s1465 + $0x8] sm:$0x3]
    %v1468 = vrot.slane %v887, 6
    %v1469 = vsel %vm896, %v1468, 0
    %v1472 = vsel %vm900, %v1467, 0
    %1474 = vmatpush.msra.mxu0 0.0
    %1475 = vmatpush.msra.mxu0 0.0
    %1476 = vmatpush.msra.mxu0 0.0
    %1477 = vmatpush.msra.mxu0 0.0
    %1478 = vmatpush.msra.mxu0 0.0
    %1479 = vmatpush.msra.mxu0 0.0
    %1480 = vmatpush.msra.mxu0 0.0
    %1481 = vmatpush.msra.mxu0 0.0
    %1482 = vmatpush.msra.mxu0 0.0
    %1483 = vmatpush.msra.mxu0 0.0
    %1484 = vmatpush.msra.mxu0 0.0
    %1485 = vmatpush.msra.mxu0 0.0
    %1486 = vmatpush.msra.mxu0 0.0
    %1487 = vmatpush.msra.mxu0 0.0
    %1488 = vmatpush.msra.mxu0 %v1472
    %1489 = vmatpush.msra.mxu0 %v1466
    %1490 = vmatmul.f32.gmra.mxu0 %v1469
    %v1491 = vpop.f32.mrf.mxu0
    %v1492 = vadd.f32 0.0, %v1491
    %1493 = vdwg.mxu0
    %v1494 = vadd.f32 %v1464, %v1492
    %v1495 = vld [vmem:[%s5] sm:$0xff]
    %v1496 = vld [vmem:[%s5 + $0x8] sm:$0x3]
    %v1497 = vld [vmem:[%s6] sm:$0x1]
    %v1499 = vperm.slane %v1497, 0
    %v1502 = vsel %vm896, %v1494, 0
    %v1505 = vsel %vm900, %v1496, 0
    %1507 = vmatpush.msra.mxu0 0.0
    %1508 = vmatpush.msra.mxu0 0.0
    %1509 = vmatpush.msra.mxu0 0.0
    %1510 = vmatpush.msra.mxu0 0.0
    %1511 = vmatpush.msra.mxu0 0.0
    %1512 = vmatpush.msra.mxu0 0.0
    %1513 = vmatpush.msra.mxu0 0.0
    %1514 = vmatpush.msra.mxu0 0.0
    %1515 = vmatpush.msra.mxu0 0.0
    %1516 = vmatpush.msra.mxu0 0.0
    %1517 = vmatpush.msra.mxu0 0.0
    %1518 = vmatpush.msra.mxu0 0.0
    %1519 = vmatpush.msra.mxu0 0.0
    %1520 = vmatpush.msra.mxu0 0.0
    %1521 = vmatpush.msra.mxu0 %v1505
    %1522 = vmatpush.msra.mxu0 %v1495
    %1523 = vmatmul.f32.gmra.mxu0 %v1502
    %v1524 = vpop.f32.mrf.mxu0
    %v1525 = vadd.f32 %v1499, %v1524
    %1526 = vdwg.mxu0
    %vm1527 = vcmask 25600
    %v1528 = vsel %vm1527, %v1525, -inf
    %1529 = vmax.xlane.f32.xlu0 %v1528
    %v1530 = vpop.xlane.xlu0 %1529
    %v1531 = vsub.f32 %v1525, %v1530
    %v1532 = vmul.f32 %v1531, 1.442695
    %v1533 = vpow.pop %v1532
    %v1534 = vsel %vm1527, %v1533, 0.0
    %1535 = vadd.xlane.f32.xlu0 %v1534
    %v1536 = vpop.xlane.xlu0 %1535
    %v1537 = vrcp.pop %v1536
    %v1538 = vmul.f32 %v1536, %v1537
    %v1539 = vsub.f32 1.0, %v1538
    %v1540 = vmul.f32 %v1537, %v1539
    %v1541 = vadd.f32 %v1537, %v1540
    %vm1542 = vweird.f32 %v1536
    %vm1543 = vweird.f32 %v1537
    %vm1544 = vmor %vm1542, %vm1543
    %v1545 = vsel %vm1544, %v1537, %v1541
    %v1546 = vand.u32 2147483647, %v1536
    %vm1547 = vcmp.eq.f32.partialorder %v1546, 8.507059e+37
    %v1548 = vand.u32 %v1536, 2147483648
    %v1549 = vor.u32 1.1754944e-38, %v1548
    %v1550 = vsel %vm1547, %v1549, %v1545
    %v1551 = vmul.f32 %v1533, %v1550
    %1552 = vst.msk [vmem:[#allocation2] sm:$0x3] %vm1527, %v1551
    // Predicated region
    $region30: #{conv_classifier2d_forward.1} parent=1 // pred_check
      _
    $region31: #{conv_classifier2d_forward.1} parent=1 // pred_check_branch
      %1554 = sbr.rel (0) target = $region33
    $region32: #{conv_classifier2d_forward.1} parent=1 // pred_region
      %1556 = vsyncadd [#allocation3], 0
      %s1558 = sshll.u32 [#allocation2], 4
      %s1559 = int_to_ptr.vmem [resolvable:$true] %s1558
      %s1560 = sshll.u32 %s7, 4
      %s1561 = int_to_ptr.hbm [resolvable:$true] %s1560
      %1563 = dma.vmem_to_hbm [thread:$0]  %s1559, 32, %s1561, [#allocation3]
    $region33: #{conv_classifier2d_forward.1} parent=1 // pred_fallthru
      _
    // Predicated region
    $region34: #{conv_classifier2d_forward.1} parent=1 // pred_check
      _
    $region35: #{conv_classifier2d_forward.1} parent=1 // pred_check_branch
      %1565 = sbr.rel (0) target = $region37
    $region36: #{conv_classifier2d_forward.1} parent=1 // pred_region
      %1567 = dma.done [#allocation3], 32
    $region37: #{conv_classifier2d_forward.1} parent=1 // pred_fallthru
      _
    %1568 = vsyncpa [#allocation3], 1

</llo_original>
